<compile_context>
chip_gen: v7x
topology: tpu7x:2x2x1
jax: 0.10.0
libtpu: 0.0.40
codegen_flags: <defaults>
</compile_context>

<pallas_src>
import functools

import jax
import jax.numpy as jnp
import numpy as np
from jax.experimental import pallas as pl
from jax.experimental.pallas import tpu as pltpu

# Set to jnp.bfloat16 on v6e/v7x for production; f32 here keeps the self-check tight.
MXU_DTYPE = jnp.float32


def _mm(a, b):
    """Full-width MXU matmul with f32 accumulation."""
    return jnp.dot(a.astype(MXU_DTYPE), b.astype(MXU_DTYPE),
                   preferred_element_type=jnp.float32)


def _layernorm(x, g, b):
    """PyTorch nn.LayerNorm semantics (biased variance, eps=1e-5); stats in f32."""
    mu = jnp.mean(x, axis=-1, keepdims=True)
    xc = x - mu
    var = jnp.mean(xc * xc, axis=-1, keepdims=True)
    return xc * jax.lax.rsqrt(var + 1e-5) * g + b


# ----------------------- fused LN + attention + residual -----------------------
def _attn_core(xn, cn, x_resid, wq_ref, wk_ref, wv_ref, wo_ref, bo_ref, o_ref,
               *, scale, heads):
    # Full-width projections: one MXU matmul each over the whole inner dim I = H*dh.
    q = _mm(xn, wq_ref[...])              # (N, I)
    k = _mm(cn, wk_ref[...])              # (M, I)
    v = _mm(cn, wv_ref[...])              # (M, I)

    inner = q.shape[-1]
    dh = inner // heads

    # Per-head sim / softmax / out (inherently a dh-wide contraction); static unrolled loop.
    outs = []
    for h in range(heads):
        sl = slice(h * dh, (h + 1) * dh)
        qh, kh, vh = q[:, sl], k[:, sl], v[:, sl]
        sim = jax.lax.dot_general(qh, kh, (((1,), (1,)), ((), ())),
                                  preferred_element_type=jnp.float32) * scale   # (N, M)
        sim = sim - jnp.max(sim, axis=-1, keepdims=True)
        p = jnp.exp(sim)
        p = p * pl.reciprocal(jnp.sum(p, axis=-1, keepdims=True), approx=True)
        outs.append(jnp.dot(p, vh, preferred_element_type=jnp.float32))          # (N, dh)
    o = jnp.concatenate(outs, axis=-1)                                           # (N, I)

    # Single full-width output projection; bias and the residual add fused here.
    out = _mm(o, wo_ref[...]) + bo_ref[...]
    o_ref[...] = (out + x_resid).astype(o_ref.dtype)


def _self_attn_block_kernel(x_ref, g_ref, b_ref, wq_ref, wk_ref, wv_ref,
                            wo_ref, bo_ref, o_ref, *, scale, heads):
    x = x_ref[...].astype(jnp.float32)                    # (N, D)
    xn = _layernorm(x, g_ref[...], b_ref[...])
    _attn_core(xn, xn, x, wq_ref, wk_ref, wv_ref, wo_ref, bo_ref, o_ref,
               scale=scale, heads=heads)


def _cross_attn_block_kernel(x_ref, c_ref, g_ref, b_ref, wq_ref, wk_ref, wv_ref,
                             wo_ref, bo_ref, o_ref, *, scale, heads):
    x = x_ref[...].astype(jnp.float32)                    # (N, D)
    xn = _layernorm(x, g_ref[...], b_ref[...])
    cn = c_ref[...].astype(jnp.float32)                   # (M, Dc) raw context (no LN), as in Layer
    _attn_core(xn, cn, x, wq_ref, wk_ref, wv_ref, wo_ref, bo_ref, o_ref,
               scale=scale, heads=heads)


def attn_block(x, gamma, beta, p, context=None):
    """out = CrossAttention(LayerNorm(x), context) + x, in a single pallas_call."""
    B, N, D = x.shape
    H, dh = p["heads"], p["dim_head"]
    scale = float(dh) ** -0.5
    g2 = gamma.reshape(1, D)
    b2 = beta.reshape(1, D)
    bo2 = p["bo"].reshape(1, D)

    # Weights/biases: index_map always (0, 0) -> resident in VMEM across grid steps.
    w_specs = [
        pl.BlockSpec((1, D), lambda b: (0, 0)),              # gamma
        pl.BlockSpec((1, D), lambda b: (0, 0)),              # beta
        pl.BlockSpec(p["wq"].shape, lambda b: (0, 0)),        # wq (D, I)
        pl.BlockSpec(p["wk"].shape, lambda b: (0, 0)),        # wk (Dc, I)
        pl.BlockSpec(p["wv"].shape, lambda b: (0, 0)),        # wv (Dc, I)
        pl.BlockSpec(p["wo"].shape, lambda b: (0, 0)),        # wo (I, D)
        pl.BlockSpec((1, D), lambda b: (0, 0)),               # bo
    ]
    # Leading batch dim squeezed (None) -> kernel sees clean 2-D (N, D) refs.
    x_spec = pl.BlockSpec((None, N, D), lambda b: (b, 0, 0))
    out_spec = pl.BlockSpec((None, N, D), lambda b: (b, 0, 0))
    cparams = pltpu.CompilerParams(dimension_semantics=("parallel",))

    if context is None:
        kern = functools.partial(_self_attn_block_kernel, scale=scale, heads=H)
        return pl.pallas_call(
            kern,
            out_shape=jax.ShapeDtypeStruct((B, N, D), x.dtype),
            grid=(B,),
            in_specs=[x_spec] + w_specs,
            out_specs=out_spec,
            compiler_params=cparams,
        )(x, g2, b2, p["wq"], p["wk"], p["wv"], p["wo"], bo2)

    M, Dc = context.shape[1], context.shape[2]
    c_spec = pl.BlockSpec((None, M, Dc), lambda b: (b, 0, 0))
    kern = functools.partial(_cross_attn_block_kernel, scale=scale, heads=H)
    return pl.pallas_call(
        kern,
        out_shape=jax.ShapeDtypeStruct((B, N, D), x.dtype),
        grid=(B,),
        in_specs=[x_spec, c_spec] + w_specs,
        out_specs=out_spec,
        compiler_params=cparams,
    )(x, context, g2, b2, p["wq"], p["wk"], p["wv"], p["wo"], bo2)


# -------------------------- fused LN + FFN + residual --------------------------
def _ffn_block_kernel(x_ref, g_ref, b_ref, w1_ref, b1_ref, w2_ref, b2_ref, o_ref):
    x = x_ref[...].astype(jnp.float32)                     # (bt, D)
    xn = _layernorm(x, g_ref[...], b_ref[...])
    h = _mm(xn, w1_ref[...]) + b1_ref[...]                 # (bt, Mh)
    h = jax.nn.gelu(h, approximate=False)                  # exact erf GELU (nn.GELU())
    out = _mm(h, w2_ref[...]) + b2_ref[...]                # (bt, D)
    o_ref[...] = (out + x).astype(o_ref.dtype)             # residual fused


def _pick_row_tile(rows):
    # v7x guidance: cap near 512 rows so in/out tiles + (tile x Mh) hidden + resident
    # W1/W2 fit the 64 MiB VMEM; v6e/v5e (128 MiB) could roughly double this.
    for t in (512, 256, 128, 64, 32, 16, 8):
        if rows % t == 0:
            return t
    return rows


def ffn_block(x, gamma, beta, p):
    """out = FeedForward(LayerNorm(x)) + x, row-tiled and pipelined."""
    B, N, D = x.shape
    Mh = p["w1"].shape[1]
    rows = B * N
    bt = _pick_row_tile(rows)
    x2 = x.reshape(rows, D)
    out = pl.pallas_call(
        _ffn_block_kernel,
        out_shape=jax.ShapeDtypeStruct((rows, D), x.dtype),
        grid=(rows // bt,),
        in_specs=[
            pl.BlockSpec((bt, D), lambda i: (i, 0)),       # activation rows (pipelined)
            pl.BlockSpec((1, D), lambda i: (0, 0)),        # gamma (resident)
            pl.BlockSpec((1, D), lambda i: (0, 0)),        # beta
            pl.BlockSpec((D, Mh), lambda i: (0, 0)),       # w1 (resident)
            pl.BlockSpec((1, Mh), lambda i: (0, 0)),       # b1
            pl.BlockSpec((Mh, D), lambda i: (0, 0)),       # w2 (resident)
            pl.BlockSpec((1, D), lambda i: (0, 0)),        # b2
        ],
        out_specs=pl.BlockSpec((bt, D), lambda i: (i, 0)),
        compiler_params=pltpu.CompilerParams(dimension_semantics=("parallel",)),
    )(x2, gamma.reshape(1, D), beta.reshape(1, D),
      p["w1"], p["b1"].reshape(1, Mh), p["w2"], p["b2"].reshape(1, D))
    return out.reshape(B, N, D)


# --------------------------------- Layer forward -------------------------------
def layer_forward(x, params, context=None):
    x = attn_block(x, params["ln1_g"], params["ln1_b"], params["attn1"], context=None)
    x = attn_block(x, params["ln2_g"], params["ln2_b"], params["attn2"], context=context)
    x = ffn_block(x, params["ln3_g"], params["ln3_b"], params["ffn"])
    return x


# ------------------------------ pure-JAX reference ------------------------------
def _ref_ln(x, g, b):
    mu = x.mean(-1, keepdims=True)
    var = ((x - mu) ** 2).mean(-1, keepdims=True)
    return (x - mu) / jnp.sqrt(var + 1e-5) * g + b


def _ref_attn(x, ctx, p):
    H, dh = p["heads"], p["dim_head"]
    B, N, _ = x.shape
    M = ctx.shape[1]
    q = (x @ p["wq"]).reshape(B, N, H, dh).transpose(0, 2, 1, 3)
    k = (ctx @ p["wk"]).reshape(B, M, H, dh).transpose(0, 2, 1, 3)
    v = (ctx @ p["wv"]).reshape(B, M, H, dh).transpose(0, 2, 1, 3)
    sim = jnp.einsum("bhid,bhjd->bhij", q, k) * (float(dh) ** -0.5)
    a = jax.nn.softmax(sim, axis=-1)
    o = jnp.einsum("bhij,bhjd->bhid", a, v).transpose(0, 2, 1, 3).reshape(B, N, H * dh)
    return o @ p["wo"] + p["bo"]


def _ref_ffn(x, p):
    h = jax.nn.gelu(x @ p["w1"] + p["b1"], approximate=False)
    return h @ p["w2"] + p["b2"]


def ref_layer(x, params, context=None):
    h1 = _ref_ln(x, params["ln1_g"], params["ln1_b"])
    x = _ref_attn(h1, h1, params["attn1"]) + x
    h2 = _ref_ln(x, params["ln2_g"], params["ln2_b"])
    ctx = context if context is not None else h2
    x = _ref_attn(h2, ctx, params["attn2"]) + x
    x = _ref_ffn(_ref_ln(x, params["ln3_g"], params["ln3_b"]), params["ffn"]) + x
    return x


# ------------------------------------- main -------------------------------------
if __name__ == "__main__":
    # Small shapes: dim=32, heads=4, dim_head=8 (inner=32), mlp_dim=64, B=2, N=8, M=8.
    B, N, M = 2, 8, 8
    dim, heads, dim_head, mlp_dim = 32, 4, 8, 64
    inner = heads * dim_head
    dim_context = dim  # Layer(dim_context=None) -> attn2 context_dim defaults to query_dim

    key = jax.random.PRNGKey(0)
    ks = jax.random.split(key, 24)

    def rnd(k, shape, s=0.1):
        return jax.random.normal(k, shape, jnp.float32) * s

    def attn_params(k0, k1, k2, k3, k4, qdim, cdim):
        return {
            "heads": heads, "dim_head": dim_head,
            "wq": rnd(k0, (qdim, inner)),
            "wk": rnd(k1, (cdim, inner)),
            "wv": rnd(k2, (cdim, inner)),
            "wo": rnd(k3, (inner, qdim)),
            "bo": rnd(k4, (qdim,)),
        }

    params = {
        "ln1_g": 1.0 + rnd(ks[0], (dim,)), "ln1_b": rnd(ks[1], (dim,)),
        "ln2_g": 1.0 + rnd(ks[2], (dim,)), "ln2_b": rnd(ks[3], (dim,)),
        "ln3_g": 1.0 + rnd(ks[4], (dim,)), "ln3_b": rnd(ks[5], (dim,)),
        "attn1": attn_params(ks[6], ks[7], ks[8], ks[9], ks[10], dim, dim),
        "attn2": attn_params(ks[11], ks[12], ks[13], ks[14], ks[15], dim, dim_context),
        "ffn": {
            "w1": rnd(ks[16], (dim, mlp_dim)), "b1": rnd(ks[17], (mlp_dim,)),
            "w2": rnd(ks[18], (mlp_dim, dim)), "b2": rnd(ks[19], (dim,)),
        },
    }

    x = jax.random.normal(ks[20], (B, N, dim), jnp.float32)
    context = jax.random.normal(ks[21], (B, M, dim_context), jnp.float32)

    out = layer_forward(x, params, context)
    out = jax.block_until_ready(out)

    ref = ref_layer(x, params, context)
    np.testing.assert_allclose(np.asarray(out), np.asarray(ref), rtol=2e-3, atol=2e-3)

    print("KERNEL_OK")
</pallas_src>

<mosaic_0001>
module attributes {stable_mosaic.version = 11 : i64} {
  func.func @_self_attn_block_kernel(%arg0: i32, %arg1: memref<1x8x32xf32, #tpu.memory_space<vmem>>, %arg2: memref<1x32xf32, #tpu.memory_space<vmem>>, %arg3: memref<1x32xf32, #tpu.memory_space<vmem>>, %arg4: memref<32x32xf32, #tpu.memory_space<vmem>>, %arg5: memref<32x32xf32, #tpu.memory_space<vmem>>, %arg6: memref<32x32xf32, #tpu.memory_space<vmem>>, %arg7: memref<32x32xf32, #tpu.memory_space<vmem>>, %arg8: memref<1x32xf32, #tpu.memory_space<vmem>>, %arg9: memref<1x8x32xf32, #tpu.memory_space<vmem>>) attributes {dimension_semantics = [#tpu.dimension_semantics<parallel>], iteration_bounds = array<i64: 2>, scalar_prefetch = 0 : i64, scratch_operands = 0 : i64, tpu.core_type = #tpu.core_type<tc>, window_params = [{transform_indices = @transform_0, window_bounds = array<i64: 1, 8, 32>}, {pipeline_mode = #tpu.pipeline_mode<synchronous>, transform_indices = @transform_1, window_bounds = array<i64: 1, 32>}, {pipeline_mode = #tpu.pipeline_mode<synchronous>, transform_indices = @transform_2, window_bounds = array<i64: 1, 32>}, {pipeline_mode = #tpu.pipeline_mode<synchronous>, transform_indices = @transform_3, window_bounds = array<i64: 32, 32>}, {pipeline_mode = #tpu.pipeline_mode<synchronous>, transform_indices = @transform_4, window_bounds = array<i64: 32, 32>}, {pipeline_mode = #tpu.pipeline_mode<synchronous>, transform_indices = @transform_5, window_bounds = array<i64: 32, 32>}, {pipeline_mode = #tpu.pipeline_mode<synchronous>, transform_indices = @transform_6, window_bounds = array<i64: 32, 32>}, {pipeline_mode = #tpu.pipeline_mode<synchronous>, transform_indices = @transform_7, window_bounds = array<i64: 1, 32>}, {transform_indices = @transform_8, window_bounds = array<i64: 1, 8, 32>}]} {
    %c0 = arith.constant 0 : index
    %c0_0 = arith.constant 0 : index
    %c0_1 = arith.constant 0 : index
    %0 = vector.load %arg1[%c0, %c0_0, %c0_1] : memref<1x8x32xf32, #tpu.memory_space<vmem>>, vector<1x8x32xf32>
    %1 = vector.shape_cast %0 : vector<1x8x32xf32> to vector<8x32xf32>
    %c0_2 = arith.constant 0 : index
    %c0_3 = arith.constant 0 : index
    %2 = vector.load %arg2[%c0_2, %c0_3] : memref<1x32xf32, #tpu.memory_space<vmem>>, vector<1x32xf32>
    %c0_4 = arith.constant 0 : index
    %c0_5 = arith.constant 0 : index
    %3 = vector.load %arg3[%c0_4, %c0_5] : memref<1x32xf32, #tpu.memory_space<vmem>>, vector<1x32xf32>
    %cst = arith.constant dense<0.000000e+00> : vector<8xf32>
    %4 = vector.multi_reduction <add>, %1, %cst [1] : vector<8x32xf32> to vector<8xf32>
    %5 = vector.shape_cast %4 : vector<8xf32> to vector<8x1xf32>
    %cst_6 = arith.constant 3.200000e+01 : f32
    %6 = vector.broadcast %cst_6 : f32 to vector<8x1xf32>
    %7 = arith.divf %5, %6 : vector<8x1xf32>
    %8 = vector.broadcast %7 : vector<8x1xf32> to vector<8x32xf32>
    %9 = arith.subf %1, %8 : vector<8x32xf32>
    %10 = arith.mulf %9, %9 : vector<8x32xf32>
    %cst_7 = arith.constant dense<0.000000e+00> : vector<8xf32>
    %11 = vector.multi_reduction <add>, %10, %cst_7 [1] : vector<8x32xf32> to vector<8xf32>
    %12 = vector.shape_cast %11 : vector<8xf32> to vector<8x1xf32>
    %cst_8 = arith.constant 3.200000e+01 : f32
    %13 = vector.broadcast %cst_8 : f32 to vector<8x1xf32>
    %14 = arith.divf %12, %13 : vector<8x1xf32>
    %cst_9 = arith.constant 9.99999974E-6 : f32
    %15 = vector.broadcast %cst_9 : f32 to vector<8x1xf32>
    %16 = arith.addf %14, %15 : vector<8x1xf32>
    %17 = math.rsqrt %16 : vector<8x1xf32>
    %18 = vector.broadcast %17 : vector<8x1xf32> to vector<8x32xf32>
    %19 = arith.mulf %9, %18 : vector<8x32xf32>
    %20 = vector.broadcast %2 : vector<1x32xf32> to vector<8x32xf32>
    %21 = arith.mulf %19, %20 : vector<8x32xf32>
    %22 = vector.broadcast %3 : vector<1x32xf32> to vector<8x32xf32>
    %23 = arith.addf %21, %22 : vector<8x32xf32>
    %c0_10 = arith.constant 0 : index
    %c0_11 = arith.constant 0 : index
    %24 = vector.load %arg4[%c0_10, %c0_11] : memref<32x32xf32, #tpu.memory_space<vmem>>, vector<32x32xf32>
    %cst_12 = arith.constant dense<0.000000e+00> : vector<8x32xf32>
    %25 = tpu.matmul %23, %24, %cst_12 {dimension_numbers = #tpu.dot_dimension_numbers<[1], [0], [0], [1], [0, 0, 1, 1], [], []>} : vector<8x32xf32>, vector<32x32xf32>, vector<8x32xf32> -> vector<8x32xf32>
    %c0_13 = arith.constant 0 : index
    %c0_14 = arith.constant 0 : index
    %26 = vector.load %arg5[%c0_13, %c0_14] : memref<32x32xf32, #tpu.memory_space<vmem>>, vector<32x32xf32>
    %cst_15 = arith.constant dense<0.000000e+00> : vector<8x32xf32>
    %27 = tpu.matmul %23, %26, %cst_15 {dimension_numbers = #tpu.dot_dimension_numbers<[1], [0], [0], [1], [0, 0, 1, 1], [], []>} : vector<8x32xf32>, vector<32x32xf32>, vector<8x32xf32> -> vector<8x32xf32>
    %c0_16 = arith.constant 0 : index
    %c0_17 = arith.constant 0 : index
    %28 = vector.load %arg6[%c0_16, %c0_17] : memref<32x32xf32, #tpu.memory_space<vmem>>, vector<32x32xf32>
    %cst_18 = arith.constant dense<0.000000e+00> : vector<8x32xf32>
    %29 = tpu.matmul %23, %28, %cst_18 {dimension_numbers = #tpu.dot_dimension_numbers<[1], [0], [0], [1], [0, 0, 1, 1], [], []>} : vector<8x32xf32>, vector<32x32xf32>, vector<8x32xf32> -> vector<8x32xf32>
    %30 = vector.extract_strided_slice %25 {offsets = [0, 0], sizes = [8, 8], strides = [1, 1]} : vector<8x32xf32> to vector<8x8xf32>
    %31 = vector.extract_strided_slice %27 {offsets = [0, 0], sizes = [8, 8], strides = [1, 1]} : vector<8x32xf32> to vector<8x8xf32>
    %32 = vector.extract_strided_slice %29 {offsets = [0, 0], sizes = [8, 8], strides = [1, 1]} : vector<8x32xf32> to vector<8x8xf32>
    %cst_19 = arith.constant dense<0.000000e+00> : vector<8x8xf32>
    %33 = tpu.matmul %30, %31, %cst_19 {dimension_numbers = #tpu.dot_dimension_numbers<[1], [1], [0], [0], [0, 0, 1, 0], [], []>} : vector<8x8xf32>, vector<8x8xf32>, vector<8x8xf32> -> vector<8x8xf32>
    %cst_20 = arith.constant 0.353553385 : f32
    %34 = vector.broadcast %cst_20 : f32 to vector<8x8xf32>
    %35 = arith.mulf %33, %34 : vector<8x8xf32>
    %cst_21 = arith.constant dense<0xFF800000> : vector<8xf32>
    %36 = vector.multi_reduction <maximumf>, %35, %cst_21 [1] : vector<8x8xf32> to vector<8xf32>
    %37 = vector.shape_cast %36 : vector<8xf32> to vector<8x1xf32>
    %38 = vector.broadcast %37 : vector<8x1xf32> to vector<8x8xf32>
    %39 = arith.subf %35, %38 : vector<8x8xf32>
    %40 = math.exp %39 : vector<8x8xf32>
    %cst_22 = arith.constant dense<0.000000e+00> : vector<8xf32>
    %41 = vector.multi_reduction <add>, %40, %cst_22 [1] : vector<8x8xf32> to vector<8xf32>
    %42 = vector.shape_cast %41 : vector<8xf32> to vector<8x1xf32>
    %43 = tpu.reciprocal %42 {approx = true} : vector<8x1xf32> -> vector<8x1xf32>
    %44 = vector.broadcast %43 : vector<8x1xf32> to vector<8x8xf32>
    %45 = arith.mulf %40, %44 : vector<8x8xf32>
    %cst_23 = arith.constant dense<0.000000e+00> : vector<8x8xf32>
    %46 = tpu.matmul %45, %32, %cst_23 {dimension_numbers = #tpu.dot_dimension_numbers<[1], [0], [0], [1], [0, 0, 1, 1], [], []>} : vector<8x8xf32>, vector<8x8xf32>, vector<8x8xf32> -> vector<8x8xf32>
    %47 = vector.extract_strided_slice %25 {offsets = [0, 8], sizes = [8, 8], strides = [1, 1]} : vector<8x32xf32> to vector<8x8xf32>
    %48 = vector.extract_strided_slice %27 {offsets = [0, 8], sizes = [8, 8], strides = [1, 1]} : vector<8x32xf32> to vector<8x8xf32>
    %49 = vector.extract_strided_slice %29 {offsets = [0, 8], sizes = [8, 8], strides = [1, 1]} : vector<8x32xf32> to vector<8x8xf32>
    %cst_24 = arith.constant dense<0.000000e+00> : vector<8x8xf32>
    %50 = tpu.matmul %47, %48, %cst_24 {dimension_numbers = #tpu.dot_dimension_numbers<[1], [1], [0], [0], [0, 0, 1, 0], [], []>} : vector<8x8xf32>, vector<8x8xf32>, vector<8x8xf32> -> vector<8x8xf32>
    %cst_25 = arith.constant 0.353553385 : f32
    %51 = vector.broadcast %cst_25 : f32 to vector<8x8xf32>
    %52 = arith.mulf %50, %51 : vector<8x8xf32>
    %cst_26 = arith.constant dense<0xFF800000> : vector<8xf32>
    %53 = vector.multi_reduction <maximumf>, %52, %cst_26 [1] : vector<8x8xf32> to vector<8xf32>
    %54 = vector.shape_cast %53 : vector<8xf32> to vector<8x1xf32>
    %55 = vector.broadcast %54 : vector<8x1xf32> to vector<8x8xf32>
    %56 = arith.subf %52, %55 : vector<8x8xf32>
    %57 = math.exp %56 : vector<8x8xf32>
    %cst_27 = arith.constant dense<0.000000e+00> : vector<8xf32>
    %58 = vector.multi_reduction <add>, %57, %cst_27 [1] : vector<8x8xf32> to vector<8xf32>
    %59 = vector.shape_cast %58 : vector<8xf32> to vector<8x1xf32>
    %60 = tpu.reciprocal %59 {approx = true} : vector<8x1xf32> -> vector<8x1xf32>
    %61 = vector.broadcast %60 : vector<8x1xf32> to vector<8x8xf32>
    %62 = arith.mulf %57, %61 : vector<8x8xf32>
    %cst_28 = arith.constant dense<0.000000e+00> : vector<8x8xf32>
    %63 = tpu.matmul %62, %49, %cst_28 {dimension_numbers = #tpu.dot_dimension_numbers<[1], [0], [0], [1], [0, 0, 1, 1], [], []>} : vector<8x8xf32>, vector<8x8xf32>, vector<8x8xf32> -> vector<8x8xf32>
    %64 = vector.extract_strided_slice %25 {offsets = [0, 16], sizes = [8, 8], strides = [1, 1]} : vector<8x32xf32> to vector<8x8xf32>
    %65 = vector.extract_strided_slice %27 {offsets = [0, 16], sizes = [8, 8], strides = [1, 1]} : vector<8x32xf32> to vector<8x8xf32>
    %66 = vector.extract_strided_slice %29 {offsets = [0, 16], sizes = [8, 8], strides = [1, 1]} : vector<8x32xf32> to vector<8x8xf32>
    %cst_29 = arith.constant dense<0.000000e+00> : vector<8x8xf32>
    %67 = tpu.matmul %64, %65, %cst_29 {dimension_numbers = #tpu.dot_dimension_numbers<[1], [1], [0], [0], [0, 0, 1, 0], [], []>} : vector<8x8xf32>, vector<8x8xf32>, vector<8x8xf32> -> vector<8x8xf32>
    %cst_30 = arith.constant 0.353553385 : f32
    %68 = vector.broadcast %cst_30 : f32 to vector<8x8xf32>
    %69 = arith.mulf %67, %68 : vector<8x8xf32>
    %cst_31 = arith.constant dense<0xFF800000> : vector<8xf32>
    %70 = vector.multi_reduction <maximumf>, %69, %cst_31 [1] : vector<8x8xf32> to vector<8xf32>
    %71 = vector.shape_cast %70 : vector<8xf32> to vector<8x1xf32>
    %72 = vector.broadcast %71 : vector<8x1xf32> to vector<8x8xf32>
    %73 = arith.subf %69, %72 : vector<8x8xf32>
    %74 = math.exp %73 : vector<8x8xf32>
    %cst_32 = arith.constant dense<0.000000e+00> : vector<8xf32>
    %75 = vector.multi_reduction <add>, %74, %cst_32 [1] : vector<8x8xf32> to vector<8xf32>
    %76 = vector.shape_cast %75 : vector<8xf32> to vector<8x1xf32>
    %77 = tpu.reciprocal %76 {approx = true} : vector<8x1xf32> -> vector<8x1xf32>
    %78 = vector.broadcast %77 : vector<8x1xf32> to vector<8x8xf32>
    %79 = arith.mulf %74, %78 : vector<8x8xf32>
    %cst_33 = arith.constant dense<0.000000e+00> : vector<8x8xf32>
    %80 = tpu.matmul %79, %66, %cst_33 {dimension_numbers = #tpu.dot_dimension_numbers<[1], [0], [0], [1], [0, 0, 1, 1], [], []>} : vector<8x8xf32>, vector<8x8xf32>, vector<8x8xf32> -> vector<8x8xf32>
    %81 = vector.extract_strided_slice %25 {offsets = [0, 24], sizes = [8, 8], strides = [1, 1]} : vector<8x32xf32> to vector<8x8xf32>
    %82 = vector.extract_strided_slice %27 {offsets = [0, 24], sizes = [8, 8], strides = [1, 1]} : vector<8x32xf32> to vector<8x8xf32>
    %83 = vector.extract_strided_slice %29 {offsets = [0, 24], sizes = [8, 8], strides = [1, 1]} : vector<8x32xf32> to vector<8x8xf32>
    %cst_34 = arith.constant dense<0.000000e+00> : vector<8x8xf32>
    %84 = tpu.matmul %81, %82, %cst_34 {dimension_numbers = #tpu.dot_dimension_numbers<[1], [1], [0], [0], [0, 0, 1, 0], [], []>} : vector<8x8xf32>, vector<8x8xf32>, vector<8x8xf32> -> vector<8x8xf32>
    %cst_35 = arith.constant 0.353553385 : f32
    %85 = vector.broadcast %cst_35 : f32 to vector<8x8xf32>
    %86 = arith.mulf %84, %85 : vector<8x8xf32>
    %cst_36 = arith.constant dense<0xFF800000> : vector<8xf32>
    %87 = vector.multi_reduction <maximumf>, %86, %cst_36 [1] : vector<8x8xf32> to vector<8xf32>
    %88 = vector.shape_cast %87 : vector<8xf32> to vector<8x1xf32>
    %89 = vector.broadcast %88 : vector<8x1xf32> to vector<8x8xf32>
    %90 = arith.subf %86, %89 : vector<8x8xf32>
    %91 = math.exp %90 : vector<8x8xf32>
    %cst_37 = arith.constant dense<0.000000e+00> : vector<8xf32>
    %92 = vector.multi_reduction <add>, %91, %cst_37 [1] : vector<8x8xf32> to vector<8xf32>
    %93 = vector.shape_cast %92 : vector<8xf32> to vector<8x1xf32>
    %94 = tpu.reciprocal %93 {approx = true} : vector<8x1xf32> -> vector<8x1xf32>
    %95 = vector.broadcast %94 : vector<8x1xf32> to vector<8x8xf32>
    %96 = arith.mulf %91, %95 : vector<8x8xf32>
    %cst_38 = arith.constant dense<0.000000e+00> : vector<8x8xf32>
    %97 = tpu.matmul %96, %83, %cst_38 {dimension_numbers = #tpu.dot_dimension_numbers<[1], [0], [0], [1], [0, 0, 1, 1], [], []>} : vector<8x8xf32>, vector<8x8xf32>, vector<8x8xf32> -> vector<8x8xf32>
    %98 = tpu.concatenate %46, %63, %80, %97 in 1 : vector<8x8xf32>, vector<8x8xf32>, vector<8x8xf32>, vector<8x8xf32> -> vector<8x32xf32>
    %c0_39 = arith.constant 0 : index
    %c0_40 = arith.constant 0 : index
    %99 = vector.load %arg7[%c0_39, %c0_40] : memref<32x32xf32, #tpu.memory_space<vmem>>, vector<32x32xf32>
    %cst_41 = arith.constant dense<0.000000e+00> : vector<8x32xf32>
    %100 = tpu.matmul %98, %99, %cst_41 {dimension_numbers = #tpu.dot_dimension_numbers<[1], [0], [0], [1], [0, 0, 1, 1], [], []>} : vector<8x32xf32>, vector<32x32xf32>, vector<8x32xf32> -> vector<8x32xf32>
    %c0_42 = arith.constant 0 : index
    %c0_43 = arith.constant 0 : index
    %101 = vector.load %arg8[%c0_42, %c0_43] : memref<1x32xf32, #tpu.memory_space<vmem>>, vector<1x32xf32>
    %102 = vector.broadcast %101 : vector<1x32xf32> to vector<8x32xf32>
    %103 = arith.addf %100, %102 : vector<8x32xf32>
    %104 = arith.addf %103, %1 : vector<8x32xf32>
    %c0_44 = arith.constant 0 : index
    %c0_45 = arith.constant 0 : index
    %c0_46 = arith.constant 0 : index
    %105 = vector.load %arg9[%c0_44, %c0_45, %c0_46] : memref<1x8x32xf32, #tpu.memory_space<vmem>>, vector<1x8x32xf32>
    %106 = vector.shape_cast %105 : vector<1x8x32xf32> to vector<8x32xf32>
    %107 = vector.shape_cast %104 : vector<8x32xf32> to vector<1x8x32xf32>
    tpu.vector_store %arg9[%c0_44, %c0_45, %c0_46], %107 {strides = array<i32>} : memref<1x8x32xf32, #tpu.memory_space<vmem>>, vector<1x8x32xf32>,
    return
  }
  func.func @transform_0(%arg0: i32) -> (i32, i32, i32) {
    %c0_i32 = arith.constant 0 : i32
    %c0_i32_0 = arith.constant 0 : i32
    %c0_i32_1 = arith.constant 0 : i32
    return %arg0, %c0_i32, %c0_i32_0 : i32, i32, i32
  }
  func.func @transform_1(%arg0: i32) -> (i32, i32) {
    %c0_i32 = arith.constant 0 : i32
    %c0_i32_0 = arith.constant 0 : i32
    %c0_i32_1 = arith.constant 0 : i32
    return %c0_i32, %c0_i32_0 : i32, i32
  }
  func.func @transform_2(%arg0: i32) -> (i32, i32) {
    %c0_i32 = arith.constant 0 : i32
    %c0_i32_0 = arith.constant 0 : i32
    %c0_i32_1 = arith.constant 0 : i32
    return %c0_i32, %c0_i32_0 : i32, i32
  }
  func.func @transform_3(%arg0: i32) -> (i32, i32) {
    %c0_i32 = arith.constant 0 : i32
    %c0_i32_0 = arith.constant 0 : i32
    %c0_i32_1 = arith.constant 0 : i32
    return %c0_i32, %c0_i32_0 : i32, i32
  }
  func.func @transform_4(%arg0: i32) -> (i32, i32) {
    %c0_i32 = arith.constant 0 : i32
    %c0_i32_0 = arith.constant 0 : i32
    %c0_i32_1 = arith.constant 0 : i32
    return %c0_i32, %c0_i32_0 : i32, i32
  }
  func.func @transform_5(%arg0: i32) -> (i32, i32) {
    %c0_i32 = arith.constant 0 : i32
    %c0_i32_0 = arith.constant 0 : i32
    %c0_i32_1 = arith.constant 0 : i32
    return %c0_i32, %c0_i32_0 : i32, i32
  }
  func.func @transform_6(%arg0: i32) -> (i32, i32) {
    %c0_i32 = arith.constant 0 : i32
    %c0_i32_0 = arith.constant 0 : i32
    %c0_i32_1 = arith.constant 0 : i32
    return %c0_i32, %c0_i32_0 : i32, i32
  }
  func.func @transform_7(%arg0: i32) -> (i32, i32) {
    %c0_i32 = arith.constant 0 : i32
    %c0_i32_0 = arith.constant 0 : i32
    %c0_i32_1 = arith.constant 0 : i32
    return %c0_i32, %c0_i32_0 : i32, i32
  }
  func.func @transform_8(%arg0: i32) -> (i32, i32, i32) {
    %c0_i32 = arith.constant 0 : i32
    %c0_i32_0 = arith.constant 0 : i32
    %c0_i32_1 = arith.constant 0 : i32
    return %arg0, %c0_i32, %c0_i32_0 : i32, i32, i32
  }
}

</mosaic_0001>

<llo_original>
// kernel: tpu_custom_call.1
$region0: #{tpu_custom_call.1}
  #allocation0 [shape = 'u32[]', space=smem, size = 0x4, offset = 0x4, fixed_abs, tag = 'smem constant byte address 0x4 - core index']
  #allocation1 [shape = 'u32[144,128]{1,0:T(1,128)}', space=vmem, size = 0x12000, scoped, tag = 'internal scratch']
  %s0 = inlined_call_operand.hbm [shape: f32[2,8,32], index: 0, kind: input, shape index: {}]
  %s1 = inlined_call_operand.vmem [shape: f32[1,32], index: 1, kind: input, shape index: {}]
  %s2 = inlined_call_operand.vmem [shape: f32[1,32], index: 2, kind: input, shape index: {}]
  %s3 = inlined_call_operand.hbm [shape: f32[32,32], index: 3, kind: input, shape index: {}]
  %s4 = inlined_call_operand.hbm [shape: f32[32,32], index: 4, kind: input, shape index: {}]
  %s5 = inlined_call_operand.hbm [shape: f32[32,32], index: 5, kind: input, shape index: {}]
  %s6 = inlined_call_operand.hbm [shape: f32[32,32], index: 6, kind: input, shape index: {}]
  %s7 = inlined_call_operand.vmem [shape: f32[1,32], index: 7, kind: input, shape index: {}]
  %s8 = inlined_call_operand.hbm [shape: f32[2,8,32], index: 8, kind: output, shape index: {}]
  %s9 = sld [smem:[#allocation0]]
  $region85: #{tpu_custom_call.1} parent=0
    _
  %s11 = ssub.s32 1, %s9
  %s12 = scalar_select 0, %s11, %s9
  $region1: #{tpu_custom_call.1} parent=0
    #allocation2 [shape = 'u8[8192]{0}', space=vmem, size = 0x2000, scoped, tag = 'input window, operand 0']
    #allocation3 [shape = 's32[2]{0}', space=sflag, size = 0x8, scoped, tag = 'scoped memory for tpu_custom_call.1']
    #allocation4 [shape = 's32[2]{0}', space=sflag, size = 0x8, scoped, tag = 'scoped memory for tpu_custom_call.1']
    #allocation5 [shape = 'u8[16384]{0}', space=vmem, size = 0x4000, scoped, tag = 'input window, operand 3, single buffered']
    #allocation6 [shape = 's32[1]{0}', space=sflag, size = 0x4, scoped, tag = 'scoped memory for tpu_custom_call.1']
    #allocation7 [shape = 'u8[16384]{0}', space=vmem, size = 0x4000, scoped, tag = 'input window, operand 4, single buffered']
    #allocation8 [shape = 'u8[16384]{0}', space=vmem, size = 0x4000, scoped, tag = 'input window, operand 5, single buffered']
    #allocation9 [shape = 's32[1]{0}', space=sflag, size = 0x4, scoped, tag = 'scoped memory for tpu_custom_call.1']
    #allocation10 [shape = 'u8[16384]{0}', space=vmem, size = 0x4000, scoped, tag = 'input window, operand 6, single buffered']
    #allocation11 [shape = 'u8[8192]{0}', space=vmem, size = 0x2000, scoped, tag = 'output window, operand 0']
    %13 = vsyncpa [#allocation3], 0
    %s14 = scalar_lea.sflag [#allocation3], 1
    %15 = vsyncpa %s14, 0
    %16 = vsyncpa [#allocation6], 0
    %17 = vsyncpa [#allocation9], 0
    %18 = vsyncpa [#allocation4], 0
    %s19 = scalar_lea.sflag [#allocation4], 1
    %20 = vsyncpa %s19, 0
    loop: start=0, step=1, limit=4
    $region2: #{tpu_custom_call.1} parent=1 // loop_pre_header
      _
    $region3: #{tpu_custom_call.1} parent=1 // loop_header
      %s22 = sphi 0, %s26
      %p23 = scmp.ge.s32.totalorder %s22, 4
      %s32 = sphi 0, %s34
      %s35 = sphi 0, %s32
      %s36 = sphi 0, %s35
      %s52 = sphi 0, %s36
      %s56 = sphi 0, %s56
      %s58 = sphi 0, %s56
      %s59 = sphi 0, %s58
      %s73 = sphi 0, %s59
      %s77 = sphi 0, %s77
      %s79 = sphi 0, %s77
      %s80 = sphi 0, %s79
      %s94 = sphi 0, %s80
      %s98 = sphi 0, %s98
      %s100 = sphi 0, %s98
      %s101 = sphi 0, %s100
      %s115 = sphi 0, %s101
      %s119 = sphi 0, %s119
      %s121 = sphi 0, %s119
      %s122 = sphi 0, %s121
      %s136 = sphi 0, %s122
      %s140 = sphi 0, %s140
      %s142 = sphi 0, %s140
      %s143 = sphi 0, %s142
      %s157 = sphi 0, %s143
      %s161 = sphi 0, %s161
      %s163 = sphi 0, %s161
      %s164 = sphi 0, %s163
      %s178 = sphi 0, %s164
      %s182 = sphi 0, %s182
      %s184 = sphi 0, %s182
      %s185 = sphi 0, %s184
      %s199 = sphi 0, %s185
      %s205 = sphi 0, %s207
      %s208 = sphi 0, %s205
      %s209 = sphi 0, %s208
      %s225 = sphi 0, %s209
    $region4: #{tpu_custom_call.1} parent=1 // loop_header_branch
      %25 = sbr.rel (%p23) target = $region8
    $region5: #{tpu_custom_call.1} parent=1 // loop_body
      %s27 = ssub.s32 %s22, 1
      %s28 = ssub.s32 %s22, 2
      %s29 = sadd.s32 %s22, 1
      %s30 = ssub.s32 %s22, %s29
      %p31 = scmp.eq.s32.totalorder %s30, 0
      %s33 = sadd.s32 %s32, 1
      %s34 = scalar_select %p31, %s32, %s33
      %p37 = pneg %p31
      %p38 = scmp.eq.s32.totalorder %s22, 1
      %p39 = por %p37, %p38
      %p40 = scmp.ne.s32.totalorder %s32, %s35
      %p41 = scmp.eq.s32.totalorder %s22, 0
      %p42 = por %p40, %p41
      %p43 = scmp.ne.s32.totalorder %s32, %s35
      %p44 = scmp.eq.s32.totalorder %s27, 1
      %p45 = por %p43, %p44
      %p46 = scmp.ne.s32.totalorder %s35, %s36
      %p47 = scmp.eq.s32.totalorder %s27, 0
      %p48 = por %p46, %p47
      %p49 = scmp.ne.s32.totalorder %s35, %s36
      %p50 = scmp.eq.s32.totalorder %s28, 1
      %p51 = por %p49, %p50
      %p53 = scmp.ne.s32.totalorder %s36, %s52
      %p54 = scmp.eq.s32.totalorder %s28, 0
      %p55 = por %p53, %p54
      %s57 = sadd.s32 %s56, 1
      %p60 = scmp.eq.s32.totalorder %s22, 1
      %p61 = scmp.ne.s32.totalorder %s56, %s58
      %p62 = scmp.eq.s32.totalorder %s22, 0
      %p63 = por %p61, %p62
      %p64 = scmp.ne.s32.totalorder %s56, %s58
      %p65 = scmp.eq.s32.totalorder %s27, 1
      %p66 = por %p64, %p65
      %p67 = scmp.ne.s32.totalorder %s58, %s59
      %p68 = scmp.eq.s32.totalorder %s27, 0
      %p69 = por %p67, %p68
      %p70 = scmp.ne.s32.totalorder %s58, %s59
      %p71 = scmp.eq.s32.totalorder %s28, 1
      %p72 = por %p70, %p71
      %p74 = scmp.ne.s32.totalorder %s59, %s73
      %p75 = scmp.eq.s32.totalorder %s28, 0
      %p76 = por %p74, %p75
      %s78 = sadd.s32 %s77, 1
      %p81 = scmp.eq.s32.totalorder %s22, 1
      %p82 = scmp.ne.s32.totalorder %s77, %s79
      %p83 = scmp.eq.s32.totalorder %s22, 0
      %p84 = por %p82, %p83
      %p85 = scmp.ne.s32.totalorder %s77, %s79
      %p86 = scmp.eq.s32.totalorder %s27, 1
      %p87 = por %p85, %p86
      %p88 = scmp.ne.s32.totalorder %s79, %s80
      %p89 = scmp.eq.s32.totalorder %s27, 0
      %p90 = por %p88, %p89
      %p91 = scmp.ne.s32.totalorder %s79, %s80
      %p92 = scmp.eq.s32.totalorder %s28, 1
      %p93 = por %p91, %p92
      %p95 = scmp.ne.s32.totalorder %s80, %s94
      %p96 = scmp.eq.s32.totalorder %s28, 0
      %p97 = por %p95, %p96
      %s99 = sadd.s32 %s98, 1
      %p102 = scmp.eq.s32.totalorder %s22, 1
      %p103 = scmp.ne.s32.totalorder %s98, %s100
      %p104 = scmp.eq.s32.totalorder %s22, 0
      %p105 = por %p103, %p104
      %p106 = scmp.ne.s32.totalorder %s98, %s100
      %p107 = scmp.eq.s32.totalorder %s27, 1
      %p108 = por %p106, %p107
      %p109 = scmp.ne.s32.totalorder %s100, %s101
      %p110 = scmp.eq.s32.totalorder %s27, 0
      %p111 = por %p109, %p110
      %p112 = scmp.ne.s32.totalorder %s100, %s101
      %p113 = scmp.eq.s32.totalorder %s28, 1
      %p114 = por %p112, %p113
      %p116 = scmp.ne.s32.totalorder %s101, %s115
      %p117 = scmp.eq.s32.totalorder %s28, 0
      %p118 = por %p116, %p117
      %s120 = sadd.s32 %s119, 1
      %p123 = scmp.eq.s32.totalorder %s22, 1
      %p124 = scmp.ne.s32.totalorder %s119, %s121
      %p125 = scmp.eq.s32.totalorder %s22, 0
      %p126 = por %p124, %p125
      %p127 = scmp.ne.s32.totalorder %s119, %s121
      %p128 = scmp.eq.s32.totalorder %s27, 1
      %p129 = por %p127, %p128
      %p130 = scmp.ne.s32.totalorder %s121, %s122
      %p131 = scmp.eq.s32.totalorder %s27, 0
      %p132 = por %p130, %p131
      %p133 = scmp.ne.s32.totalorder %s121, %s122
      %p134 = scmp.eq.s32.totalorder %s28, 1
      %p135 = por %p133, %p134
      %p137 = scmp.ne.s32.totalorder %s122, %s136
      %p138 = scmp.eq.s32.totalorder %s28, 0
      %p139 = por %p137, %p138
      %s141 = sadd.s32 %s140, 1
      %p144 = scmp.eq.s32.totalorder %s22, 1
      %p145 = scmp.ne.s32.totalorder %s140, %s142
      %p146 = scmp.eq.s32.totalorder %s22, 0
      %p147 = por %p145, %p146
      %p148 = scmp.ne.s32.totalorder %s140, %s142
      %p149 = scmp.eq.s32.totalorder %s27, 1
      %p150 = por %p148, %p149
      %p151 = scmp.ne.s32.totalorder %s142, %s143
      %p152 = scmp.eq.s32.totalorder %s27, 0
      %p153 = por %p151, %p152
      %p154 = scmp.ne.s32.totalorder %s142, %s143
      %p155 = scmp.eq.s32.totalorder %s28, 1
      %p156 = por %p154, %p155
      %p158 = scmp.ne.s32.totalorder %s143, %s157
      %p159 = scmp.eq.s32.totalorder %s28, 0
      %p160 = por %p158, %p159
      %s162 = sadd.s32 %s161, 1
      %p165 = scmp.eq.s32.totalorder %s22, 1
      %p166 = scmp.ne.s32.totalorder %s161, %s163
      %p167 = scmp.eq.s32.totalorder %s22, 0
      %p168 = por %p166, %p167
      %p169 = scmp.ne.s32.totalorder %s161, %s163
      %p170 = scmp.eq.s32.totalorder %s27, 1
      %p171 = por %p169, %p170
      %p172 = scmp.ne.s32.totalorder %s163, %s164
      %p173 = scmp.eq.s32.totalorder %s27, 0
      %p174 = por %p172, %p173
      %p175 = scmp.ne.s32.totalorder %s163, %s164
      %p176 = scmp.eq.s32.totalorder %s28, 1
      %p177 = por %p175, %p176
      %p179 = scmp.ne.s32.totalorder %s164, %s178
      %p180 = scmp.eq.s32.totalorder %s28, 0
      %p181 = por %p179, %p180
      %s183 = sadd.s32 %s182, 1
      %p186 = scmp.eq.s32.totalorder %s22, 1
      %p187 = scmp.ne.s32.totalorder %s182, %s184
      %p188 = scmp.eq.s32.totalorder %s22, 0
      %p189 = por %p187, %p188
      %p190 = scmp.ne.s32.totalorder %s182, %s184
      %p191 = scmp.eq.s32.totalorder %s27, 1
      %p192 = por %p190, %p191
      %p193 = scmp.ne.s32.totalorder %s184, %s185
      %p194 = scmp.eq.s32.totalorder %s27, 0
      %p195 = por %p193, %p194
      %p196 = scmp.ne.s32.totalorder %s184, %s185
      %p197 = scmp.eq.s32.totalorder %s28, 1
      %p198 = por %p196, %p197
      %p200 = scmp.ne.s32.totalorder %s185, %s199
      %p201 = scmp.eq.s32.totalorder %s28, 0
      %p202 = por %p200, %p201
      %s203 = ssub.s32 %s22, %s29
      %p204 = scmp.eq.s32.totalorder %s203, 0
      %s206 = sadd.s32 %s205, 1
      %s207 = scalar_select %p204, %s205, %s206
      %p210 = pneg %p204
      %p211 = scmp.eq.s32.totalorder %s22, 1
      %p212 = por %p210, %p211
      %p213 = scmp.ne.s32.totalorder %s205, %s208
      %p214 = scmp.eq.s32.totalorder %s22, 0
      %p215 = por %p213, %p214
      %p216 = scmp.ne.s32.totalorder %s205, %s208
      %p217 = scmp.eq.s32.totalorder %s27, 1
      %p218 = por %p216, %p217
      %p219 = scmp.ne.s32.totalorder %s208, %s209
      %p220 = scmp.eq.s32.totalorder %s27, 0
      %p221 = por %p219, %p220
      %p222 = scmp.ne.s32.totalorder %s208, %s209
      %p223 = scmp.eq.s32.totalorder %s28, 1
      %p224 = por %p222, %p223
      %p226 = scmp.ne.s32.totalorder %s209, %s225
      %p227 = scmp.eq.s32.totalorder %s28, 0
      %p228 = por %p226, %p227
      %p229 = scmp.le.s32.totalorder 1, %s22
      %p230 = scmp.lt.s32.totalorder %s22, 3
      %p231 = pnand %p229, %p230
      %p232 = pneg %p231
      // Predicated region
      $region9: #{tpu_custom_call.1} parent=5 // pred_check
        _
      $region10: #{tpu_custom_call.1} parent=5 // pred_check_branch
        %234 = sbr.rel (%p231) target = $region12
      $region11: #{tpu_custom_call.1} parent=5 // pred_region
        %s235 = ssub.s32 %s22, 1
        // Predicated region
        $region13: #{tpu_custom_call.1} parent=11 // pred_check
          %p236 = pneg %p69
        $region14: #{tpu_custom_call.1} parent=11 // pred_check_branch
          %238 = sbr.rel (%p236) target = $region16
        $region15: #{tpu_custom_call.1} parent=11 // pred_region
          _
        $region16: #{tpu_custom_call.1} parent=11 // pred_fallthru
          _
        // Predicated region
        $region17: #{tpu_custom_call.1} parent=11 // pred_check
          %p239 = pneg %p90
        $region18: #{tpu_custom_call.1} parent=11 // pred_check_branch
          %241 = sbr.rel (%p239) target = $region20
        $region19: #{tpu_custom_call.1} parent=11 // pred_region
          _
        $region20: #{tpu_custom_call.1} parent=11 // pred_fallthru
          _
        // Predicated region
        $region21: #{tpu_custom_call.1} parent=11 // pred_check
          %p242 = pneg %p111
        $region22: #{tpu_custom_call.1} parent=11 // pred_check_branch
          %244 = sbr.rel (%p242) target = $region24
        $region23: #{tpu_custom_call.1} parent=11 // pred_region
          %s246 = ssub.s32 512, 512
          %247 = vsyncadd [#allocation6], %s246
          %s248 = sshll.u32 [#allocation5], 4
          %s249 = int_to_ptr.vmem [resolvable:$true] %s248
          %254 = dma.hbm_to_vmem [thread:$0]  %s3, 512, %s249, [#allocation6], 128, 128, 8
        $region24: #{tpu_custom_call.1} parent=11 // pred_fallthru
          _
        // Predicated region
        $region25: #{tpu_custom_call.1} parent=11 // pred_check
          %p255 = pneg %p132
        $region26: #{tpu_custom_call.1} parent=11 // pred_check_branch
          %257 = sbr.rel (%p255) target = $region28
        $region27: #{tpu_custom_call.1} parent=11 // pred_region
          %s259 = ssub.s32 512, 512
          %260 = vsyncadd [#allocation6], %s259
          %s261 = sshll.u32 [#allocation7], 4
          %s262 = int_to_ptr.vmem [resolvable:$true] %s261
          %267 = dma.hbm_to_vmem [thread:$0]  %s4, 512, %s262, [#allocation6], 128, 128, 8
        $region28: #{tpu_custom_call.1} parent=11 // pred_fallthru
          _
        // Predicated region
        $region29: #{tpu_custom_call.1} parent=11 // pred_check
          %p268 = pneg %p153
        $region30: #{tpu_custom_call.1} parent=11 // pred_check_branch
          %270 = sbr.rel (%p268) target = $region32
        $region31: #{tpu_custom_call.1} parent=11 // pred_region
          %s272 = ssub.s32 512, 512
          %273 = vsyncadd [#allocation9], %s272
          %s274 = sshll.u32 [#allocation8], 4
          %s275 = int_to_ptr.vmem [resolvable:$true] %s274
          %280 = dma.hbm_to_vmem [thread:$0]  %s5, 512, %s275, [#allocation9], 128, 128, 8
        $region32: #{tpu_custom_call.1} parent=11 // pred_fallthru
          _
        // Predicated region
        $region33: #{tpu_custom_call.1} parent=11 // pred_check
          %p281 = pneg %p174
        $region34: #{tpu_custom_call.1} parent=11 // pred_check_branch
          %283 = sbr.rel (%p281) target = $region36
        $region35: #{tpu_custom_call.1} parent=11 // pred_region
          %s285 = ssub.s32 512, 512
          %286 = vsyncadd [#allocation9], %s285
          %s287 = sshll.u32 [#allocation10], 4
          %s288 = int_to_ptr.vmem [resolvable:$true] %s287
          %293 = dma.hbm_to_vmem [thread:$0]  %s6, 512, %s288, [#allocation9], 128, 128, 8
        $region36: #{tpu_custom_call.1} parent=11 // pred_fallthru
          _
        // Predicated region
        $region37: #{tpu_custom_call.1} parent=11 // pred_check
          %p294 = pneg %p195
        $region38: #{tpu_custom_call.1} parent=11 // pred_check_branch
          %296 = sbr.rel (%p294) target = $region40
        $region39: #{tpu_custom_call.1} parent=11 // pred_region
          _
        $region40: #{tpu_custom_call.1} parent=11 // pred_fallthru
          _
      $region12: #{tpu_custom_call.1} parent=5 // pred_fallthru
        _
      %p297 = scmp.lt.s32.totalorder %s22, 2
      // Predicated region
      $region41: #{tpu_custom_call.1} parent=5 // pred_check
        %p298 = pneg %p297
      $region42: #{tpu_custom_call.1} parent=5 // pred_check_branch
        %300 = sbr.rel (%p298) target = $region44
      $region43: #{tpu_custom_call.1} parent=5 // pred_region
        // Predicated region
        $region45: #{tpu_custom_call.1} parent=43 // pred_check
          %p301 = pneg %p42
        $region46: #{tpu_custom_call.1} parent=43 // pred_check_branch
          %303 = sbr.rel (%p301) target = $region48
        $region47: #{tpu_custom_call.1} parent=43 // pred_region
          %s304 = sand.u32 %s32, 1
          %s305 = scalar_lea.sflag [#allocation3], %s304
          %s306 = sand.u32 %s32, 1
          %s307 = smul.addr %s306, 8
          %s308 = scalar_lea.vmem [#allocation2], %s307
          %s310 = ssub.s32 128, 128
          %311 = vsyncadd %s305, %s310
          %s312 = smul.addr %s22, 128
          %s313 = scalar_lea.hbm %s0, %s312
          %s315 = sshll.u32 %s308, 4
          %s316 = int_to_ptr.vmem [resolvable:$true] %s315
          %318 = dma.hbm_to_vmem [thread:$0]  %s313, 128, %s316, %s305
        $region48: #{tpu_custom_call.1} parent=43 // pred_fallthru
          _
      $region44: #{tpu_custom_call.1} parent=5 // pred_fallthru
        _
      %p319 = scmp.le.s32.totalorder 1, %s22
      %p320 = scmp.lt.s32.totalorder %s22, 3
      %p321 = pnand %p319, %p320
      %p322 = pneg %p321
      // Predicated region
      $region49: #{tpu_custom_call.1} parent=5 // pred_check
        _
      $region50: #{tpu_custom_call.1} parent=5 // pred_check_branch
        %324 = sbr.rel (%p321) target = $region52
      $region51: #{tpu_custom_call.1} parent=5 // pred_region
        %s325 = ssub.s32 %s22, 1
        %s326 = sand.u32 %s35, 1
        %s327 = scalar_lea.sflag [#allocation3], %s326
        %s328 = sand.u32 %s35, 1
        %s329 = smul.addr %s328, 8
        %s330 = scalar_lea.vmem [#allocation2], %s329
        // Predicated region
        $region53: #{tpu_custom_call.1} parent=51 // pred_check
          %p331 = pneg %p48
        $region54: #{tpu_custom_call.1} parent=51 // pred_check_branch
          %333 = sbr.rel (%p331) target = $region56
        $region55: #{tpu_custom_call.1} parent=51 // pred_region
          %334 = dma.done %s327, 128
        $region56: #{tpu_custom_call.1} parent=51 // pred_fallthru
          _
        // Predicated region
        $region57: #{tpu_custom_call.1} parent=51 // pred_check
          %p335 = pneg %p111
        $region58: #{tpu_custom_call.1} parent=51 // pred_check_branch
          %337 = sbr.rel (%p335) target = $region60
        $region59: #{tpu_custom_call.1} parent=51 // pred_region
          %338 = dma.done [#allocation6], 512
        $region60: #{tpu_custom_call.1} parent=51 // pred_fallthru
          _
        // Predicated region
        $region61: #{tpu_custom_call.1} parent=51 // pred_check
          %p339 = pneg %p132
        $region62: #{tpu_custom_call.1} parent=51 // pred_check_branch
          %341 = sbr.rel (%p339) target = $region64
        $region63: #{tpu_custom_call.1} parent=51 // pred_region
          %342 = dma.done [#allocation6], 512
        $region64: #{tpu_custom_call.1} parent=51 // pred_fallthru
          _
        // Predicated region
        $region65: #{tpu_custom_call.1} parent=51 // pred_check
          %p343 = pneg %p153
        $region66: #{tpu_custom_call.1} parent=51 // pred_check_branch
          %345 = sbr.rel (%p343) target = $region68
        $region67: #{tpu_custom_call.1} parent=51 // pred_region
          %346 = dma.done [#allocation9], 512
        $region68: #{tpu_custom_call.1} parent=51 // pred_fallthru
          _
        // Predicated region
        $region69: #{tpu_custom_call.1} parent=51 // pred_check
          %p347 = pneg %p174
        $region70: #{tpu_custom_call.1} parent=51 // pred_check_branch
          %349 = sbr.rel (%p347) target = $region72
        $region71: #{tpu_custom_call.1} parent=51 // pred_region
          %350 = dma.done [#allocation9], 512
        $region72: #{tpu_custom_call.1} parent=51 // pred_fallthru
          _
        %s351 = sand.u32 %s35, 1
        %s352 = scalar_lea.sflag [#allocation3], %s351
        %s353 = sand.u32 %s35, 1
        %s354 = smul.addr %s353, 8
        %s355 = scalar_lea.vmem [#allocation2], %s354
        %p356 = pneg %p48
        %p357 = pneg %p45
        %p358 = pneg %p69
        %p359 = pneg %p66
        %p360 = pneg %p90
        %p361 = pneg %p87
        %p362 = pneg %p111
        %p363 = pneg %p108
        %p364 = pneg %p132
        %p365 = pneg %p129
        %p366 = pneg %p153
        %p367 = pneg %p150
        %p368 = pneg %p174
        %p369 = pneg %p171
        %p370 = pneg %p195
        %p371 = pneg %p192
        %p372 = pneg %p221
        %p373 = pneg %p218
        %s374 = sand.u32 %s208, 1
        %s375 = scalar_lea.sflag [#allocation4], %s374
        %s376 = sand.u32 %s208, 1
        %s377 = smul.addr %s376, 8
        %s378 = scalar_lea.vmem [#allocation11], %s377
        %v379 = vld [vmem:[%s330] sm:$0xff]
        %v380 = vld [vmem:[%s1] sm:$0x1]
        %v381 = vld [vmem:[%s2] sm:$0x1]
        %vm382 = vcmask 261120
        %v383 = vsel %vm382, %v379, 0.0
        %384 = vadd.xlane.f32.xlu0 %v383
        %v385 = vpop.xlane.xlu0 %384
        %v386 = vrcp.pop 32.0
        %v387 = vmul.f32 %v385, %v386
        %v388 = vsub.f32 %v379, %v387
        %v389 = vmul.f32 %v388, %v388
        %v390 = vsel %vm382, %v389, 0.0
        %391 = vadd.xlane.f32.xlu0 %v390
        %v392 = vpop.xlane.xlu0 %391
        %v393 = vmul.f32 %v392, %v386
        %v394 = vadd.f32 %v393, 1e-05
        %v395 = vrsqrt.pop %v394
        %v396 = vmul.f32 %v388, %v395
        %v398 = vlaneseq
        %v399 = vshrl.u32 %v398, 7
        %v400 = vsub.s32 0, %v399
        %v401 = vrot.slane %v380, %v400
        %v403 = vmul.f32 %v396, %v401
        %v405 = vlaneseq
        %v406 = vshrl.u32 %v405, 7
        %v407 = vsub.s32 0, %v406
        %v408 = vrot.slane %v381, %v407
        %v410 = vadd.f32 %v403, %v408
        %v411 = vld [vmem:[#allocation5] sm:$0xff]
        %v412 = vld [vmem:[#allocation5 + $0x8] sm:$0xff]
        %v413 = vld [vmem:[#allocation5 + $0x10] sm:$0xff]
        %v414 = vld [vmem:[#allocation5 + $0x18] sm:$0xff]
        %v416 = vsel %vm382, %v410, 0
        %418 = vmatprep.subr.mxu0 0.0
        %419 = vmatpush1.msra.mxu0 %v411
        %420 = vmatprep.subr.mxu0 0.0
        %421 = vmatpush1.msra.mxu0 %v412
        %422 = vmatprep.subr.mxu0 0.0
        %423 = vmatpush1.msra.mxu0 %v413
        %424 = vmatprep.subr.mxu0 0.0
        %425 = vmatpush1.msra.mxu0 %v414
        %426 = vmatprep.subr.mxu0 0.0
        %427 = vmatpush1.msra.mxu0 0.0
        %428 = vmatprep.subr.mxu0 0.0
        %429 = vmatpush1.msra.mxu0 0.0
        %430 = vmatprep.subr.mxu0 0.0
        %431 = vmatpush1.msra.mxu0 0.0
        %432 = vmatprep.subr.mxu0 0.0
        %433 = vmatpush1.msra.mxu0 0.0
        %434 = vmatprep.subr.mxu0 0.0
        %435 = vmatpush1.msra.mxu0 0.0
        %436 = vmatprep.subr.mxu0 0.0
        %437 = vmatpush1.msra.mxu0 0.0
        %438 = vmatprep.subr.mxu0 0.0
        %439 = vmatpush1.msra.mxu0 0.0
        %440 = vmatprep.subr.mxu0 0.0
        %441 = vmatpush1.msra.mxu0 0.0
        %442 = vmatprep.subr.mxu0 0.0
        %443 = vmatpush1.msra.mxu0 0.0
        %444 = vmatprep.subr.mxu0 0.0
        %445 = vmatpush1.msra.mxu0 0.0
        %446 = vmatprep.subr.mxu0 0.0
        %447 = vmatpush1.msra.mxu0 0.0
        %448 = vmatprep.subr.mxu0 0.0
        %449 = vmatpush1.msra.mxu0 0.0
        %450 = vmatprep.subr.mxu0 0.0
        %451 = vmatpush1.msra.mxu0 0.0
        %452 = vmatprep.subr.mxu0 0.0
        %453 = vmatpush1.msra.mxu0 0.0
        %454 = vmatprep.subr.mxu0 0.0
        %455 = vmatpush1.msra.mxu0 0.0
        %456 = vmatprep.subr.mxu0 0.0
        %457 = vmatpush1.msra.mxu0 0.0
        %458 = vmatprep.subr.mxu0 0.0
        %459 = vmatpush1.msra.mxu0 0.0
        %460 = vmatprep.subr.mxu0 0.0
        %461 = vmatpush1.msra.mxu0 0.0
        %462 = vmatprep.subr.mxu0 0.0
        %463 = vmatpush1.msra.mxu0 0.0
        %464 = vmatprep.subr.mxu0 0.0
        %465 = vmatpush1.msra.mxu0 0.0
        %466 = vmatprep.subr.mxu0 0.0
        %467 = vmatpush1.msra.mxu0 0.0
        %468 = vmatprep.subr.mxu0 0.0
        %469 = vmatpush1.msra.mxu0 0.0
        %470 = vmatprep.subr.mxu0 0.0
        %471 = vmatpush1.msra.mxu0 0.0
        %472 = vmatprep.subr.mxu0 0.0
        %473 = vmatpush1.msra.mxu0 0.0
        %474 = vmatprep.subr.mxu0 0.0
        %475 = vmatpush1.msra.mxu0 0.0
        %476 = vmatprep.subr.mxu0 0.0
        %477 = vmatpush1.msra.mxu0 0.0
        %478 = vmatprep.subr.mxu0 0.0
        %479 = vmatpush1.msra.mxu0 0.0
        %480 = vmatprep.subr.mxu0 0.0
        %481 = vmatpush1.msra.mxu0 0.0
        %482 = vmatprep.mubr.f32.mxu0 0.0
        %483 = vmatmul.mubr.f32.gmra.mrb[0].mxu0 %v416
        %v484 = vpop.f32.mrb[0].mxu0
        %v485 = vadd.f32 0.0, %v484
        %v486 = vpop.f32.mrb[0].mxu0
        %487 = vdwg.mxu0
        %v488 = vld [vmem:[#allocation7] sm:$0xff]
        %v489 = vld [vmem:[#allocation7 + $0x8] sm:$0xff]
        %v490 = vld [vmem:[#allocation7 + $0x10] sm:$0xff]
        %v491 = vld [vmem:[#allocation7 + $0x18] sm:$0xff]
        %492 = vmatprep.subr.mxu0 0.0
        %493 = vmatpush1.msra.mxu0 %v488
        %494 = vmatprep.subr.mxu0 0.0
        %495 = vmatpush1.msra.mxu0 %v489
        %496 = vmatprep.subr.mxu0 0.0
        %497 = vmatpush1.msra.mxu0 %v490
        %498 = vmatprep.subr.mxu0 0.0
        %499 = vmatpush1.msra.mxu0 %v491
        %500 = vmatprep.subr.mxu0 0.0
        %501 = vmatpush1.msra.mxu0 0.0
        %502 = vmatprep.subr.mxu0 0.0
        %503 = vmatpush1.msra.mxu0 0.0
        %504 = vmatprep.subr.mxu0 0.0
        %505 = vmatpush1.msra.mxu0 0.0
        %506 = vmatprep.subr.mxu0 0.0
        %507 = vmatpush1.msra.mxu0 0.0
        %508 = vmatprep.subr.mxu0 0.0
        %509 = vmatpush1.msra.mxu0 0.0
        %510 = vmatprep.subr.mxu0 0.0
        %511 = vmatpush1.msra.mxu0 0.0
        %512 = vmatprep.subr.mxu0 0.0
        %513 = vmatpush1.msra.mxu0 0.0
        %514 = vmatprep.subr.mxu0 0.0
        %515 = vmatpush1.msra.mxu0 0.0
        %516 = vmatprep.subr.mxu0 0.0
        %517 = vmatpush1.msra.mxu0 0.0
        %518 = vmatprep.subr.mxu0 0.0
        %519 = vmatpush1.msra.mxu0 0.0
        %520 = vmatprep.subr.mxu0 0.0
        %521 = vmatpush1.msra.mxu0 0.0
        %522 = vmatprep.subr.mxu0 0.0
        %523 = vmatpush1.msra.mxu0 0.0
        %524 = vmatprep.subr.mxu0 0.0
        %525 = vmatpush1.msra.mxu0 0.0
        %526 = vmatprep.subr.mxu0 0.0
        %527 = vmatpush1.msra.mxu0 0.0
        %528 = vmatprep.subr.mxu0 0.0
        %529 = vmatpush1.msra.mxu0 0.0
        %530 = vmatprep.subr.mxu0 0.0
        %531 = vmatpush1.msra.mxu0 0.0
        %532 = vmatprep.subr.mxu0 0.0
        %533 = vmatpush1.msra.mxu0 0.0
        %534 = vmatprep.subr.mxu0 0.0
        %535 = vmatpush1.msra.mxu0 0.0
        %536 = vmatprep.subr.mxu0 0.0
        %537 = vmatpush1.msra.mxu0 0.0
        %538 = vmatprep.subr.mxu0 0.0
        %539 = vmatpush1.msra.mxu0 0.0
        %540 = vmatprep.subr.mxu0 0.0
        %541 = vmatpush1.msra.mxu0 0.0
        %542 = vmatprep.subr.mxu0 0.0
        %543 = vmatpush1.msra.mxu0 0.0
        %544 = vmatprep.subr.mxu0 0.0
        %545 = vmatpush1.msra.mxu0 0.0
        %546 = vmatprep.subr.mxu0 0.0
        %547 = vmatpush1.msra.mxu0 0.0
        %548 = vmatprep.subr.mxu0 0.0
        %549 = vmatpush1.msra.mxu0 0.0
        %550 = vmatprep.subr.mxu0 0.0
        %551 = vmatpush1.msra.mxu0 0.0
        %552 = vmatprep.subr.mxu0 0.0
        %553 = vmatpush1.msra.mxu0 0.0
        %554 = vmatprep.subr.mxu0 0.0
        %555 = vmatpush1.msra.mxu0 0.0
        %556 = vmatprep.mubr.f32.mxu0 0.0
        %557 = vmatmul.mubr.f32.gmra.mrb[0].mxu0 %v416
        %v558 = vpop.f32.mrb[0].mxu0
        %v559 = vadd.f32 0.0, %v558
        %v560 = vpop.f32.mrb[0].mxu0
        %561 = vdwg.mxu0
        %v562 = vld [vmem:[#allocation8] sm:$0xff]
        %v563 = vld [vmem:[#allocation8 + $0x8] sm:$0xff]
        %v564 = vld [vmem:[#allocation8 + $0x10] sm:$0xff]
        %v565 = vld [vmem:[#allocation8 + $0x18] sm:$0xff]
        %566 = vmatprep.subr.mxu0 0.0
        %567 = vmatpush1.msra.mxu0 %v562
        %568 = vmatprep.subr.mxu0 0.0
        %569 = vmatpush1.msra.mxu0 %v563
        %570 = vmatprep.subr.mxu0 0.0
        %571 = vmatpush1.msra.mxu0 %v564
        %572 = vmatprep.subr.mxu0 0.0
        %573 = vmatpush1.msra.mxu0 %v565
        %574 = vmatprep.subr.mxu0 0.0
        %575 = vmatpush1.msra.mxu0 0.0
        %576 = vmatprep.subr.mxu0 0.0
        %577 = vmatpush1.msra.mxu0 0.0
        %578 = vmatprep.subr.mxu0 0.0
        %579 = vmatpush1.msra.mxu0 0.0
        %580 = vmatprep.subr.mxu0 0.0
        %581 = vmatpush1.msra.mxu0 0.0
        %582 = vmatprep.subr.mxu0 0.0
        %583 = vmatpush1.msra.mxu0 0.0
        %584 = vmatprep.subr.mxu0 0.0
        %585 = vmatpush1.msra.mxu0 0.0
        %586 = vmatprep.subr.mxu0 0.0
        %587 = vmatpush1.msra.mxu0 0.0
        %588 = vmatprep.subr.mxu0 0.0
        %589 = vmatpush1.msra.mxu0 0.0
        %590 = vmatprep.subr.mxu0 0.0
        %591 = vmatpush1.msra.mxu0 0.0
        %592 = vmatprep.subr.mxu0 0.0
        %593 = vmatpush1.msra.mxu0 0.0
        %594 = vmatprep.subr.mxu0 0.0
        %595 = vmatpush1.msra.mxu0 0.0
        %596 = vmatprep.subr.mxu0 0.0
        %597 = vmatpush1.msra.mxu0 0.0
        %598 = vmatprep.subr.mxu0 0.0
        %599 = vmatpush1.msra.mxu0 0.0
        %600 = vmatprep.subr.mxu0 0.0
        %601 = vmatpush1.msra.mxu0 0.0
        %602 = vmatprep.subr.mxu0 0.0
        %603 = vmatpush1.msra.mxu0 0.0
        %604 = vmatprep.subr.mxu0 0.0
        %605 = vmatpush1.msra.mxu0 0.0
        %606 = vmatprep.subr.mxu0 0.0
        %607 = vmatpush1.msra.mxu0 0.0
        %608 = vmatprep.subr.mxu0 0.0
        %609 = vmatpush1.msra.mxu0 0.0
        %610 = vmatprep.subr.mxu0 0.0
        %611 = vmatpush1.msra.mxu0 0.0
        %612 = vmatprep.subr.mxu0 0.0
        %613 = vmatpush1.msra.mxu0 0.0
        %614 = vmatprep.subr.mxu0 0.0
        %615 = vmatpush1.msra.mxu0 0.0
        %616 = vmatprep.subr.mxu0 0.0
        %617 = vmatpush1.msra.mxu0 0.0
        %618 = vmatprep.subr.mxu0 0.0
        %619 = vmatpush1.msra.mxu0 0.0
        %620 = vmatprep.subr.mxu0 0.0
        %621 = vmatpush1.msra.mxu0 0.0
        %622 = vmatprep.subr.mxu0 0.0
        %623 = vmatpush1.msra.mxu0 0.0
        %624 = vmatprep.subr.mxu0 0.0
        %625 = vmatpush1.msra.mxu0 0.0
        %626 = vmatprep.subr.mxu0 0.0
        %627 = vmatpush1.msra.mxu0 0.0
        %628 = vmatprep.subr.mxu0 0.0
        %629 = vmatpush1.msra.mxu0 0.0
        %630 = vmatprep.mubr.f32.mxu0 0.0
        %631 = vmatmul.mubr.f32.gmra.mrb[0].mxu0 %v416
        %v632 = vpop.f32.mrb[0].mxu0
        %v633 = vadd.f32 0.0, %v632
        %v634 = vpop.f32.mrb[0].mxu0
        %635 = vdwg.mxu0
        %vm636 = vcmask 64512
        %v638 = vsel %vm636, %v485, 0
        %v641 = vsel %vm636, %v559, 0
        %643 = vmatprep.subr.mxu0 0.0
        %644 = vmatpush1.xpose.msra.mxu0 %v641
        %645 = vmatprep.subr.mxu0 0.0
        %646 = vmatpush1.xpose.msra.mxu0 0.0
        %647 = vmatprep.subr.mxu0 0.0
        %648 = vmatpush1.xpose.msra.mxu0 0.0
        %649 = vmatprep.subr.mxu0 0.0
        %650 = vmatpush1.xpose.msra.mxu0 0.0
        %651 = vmatprep.subr.mxu0 0.0
        %652 = vmatpush1.xpose.msra.mxu0 0.0
        %653 = vmatprep.subr.mxu0 0.0
        %654 = vmatpush1.xpose.msra.mxu0 0.0
        %655 = vmatprep.subr.mxu0 0.0
        %656 = vmatpush1.xpose.msra.mxu0 0.0
        %657 = vmatprep.subr.mxu0 0.0
        %658 = vmatpush1.xpose.msra.mxu0 0.0
        %659 = vmatprep.subr.mxu0 0.0
        %660 = vmatpush1.xpose.msra.mxu0 0.0
        %661 = vmatprep.subr.mxu0 0.0
        %662 = vmatpush1.xpose.msra.mxu0 0.0
        %663 = vmatprep.subr.mxu0 0.0
        %664 = vmatpush1.xpose.msra.mxu0 0.0
        %665 = vmatprep.subr.mxu0 0.0
        %666 = vmatpush1.xpose.msra.mxu0 0.0
        %667 = vmatprep.subr.mxu0 0.0
        %668 = vmatpush1.xpose.msra.mxu0 0.0
        %669 = vmatprep.subr.mxu0 0.0
        %670 = vmatpush1.xpose.msra.mxu0 0.0
        %671 = vmatprep.subr.mxu0 0.0
        %672 = vmatpush1.xpose.msra.mxu0 0.0
        %673 = vmatprep.subr.mxu0 0.0
        %674 = vmatpush1.xpose.msra.mxu0 0.0
        %675 = vmatprep.subr.mxu0 0.0
        %676 = vmatpush1.xpose.msra.mxu0 0.0
        %677 = vmatprep.subr.mxu0 0.0
        %678 = vmatpush1.xpose.msra.mxu0 0.0
        %679 = vmatprep.subr.mxu0 0.0
        %680 = vmatpush1.xpose.msra.mxu0 0.0
        %681 = vmatprep.subr.mxu0 0.0
        %682 = vmatpush1.xpose.msra.mxu0 0.0
        %683 = vmatprep.subr.mxu0 0.0
        %684 = vmatpush1.xpose.msra.mxu0 0.0
        %685 = vmatprep.subr.mxu0 0.0
        %686 = vmatpush1.xpose.msra.mxu0 0.0
        %687 = vmatprep.subr.mxu0 0.0
        %688 = vmatpush1.xpose.msra.mxu0 0.0
        %689 = vmatprep.subr.mxu0 0.0
        %690 = vmatpush1.xpose.msra.mxu0 0.0
        %691 = vmatprep.subr.mxu0 0.0
        %692 = vmatpush1.xpose.msra.mxu0 0.0
        %693 = vmatprep.subr.mxu0 0.0
        %694 = vmatpush1.xpose.msra.mxu0 0.0
        %695 = vmatprep.subr.mxu0 0.0
        %696 = vmatpush1.xpose.msra.mxu0 0.0
        %697 = vmatprep.subr.mxu0 0.0
        %698 = vmatpush1.xpose.msra.mxu0 0.0
        %699 = vmatprep.subr.mxu0 0.0
        %700 = vmatpush1.xpose.msra.mxu0 0.0
        %701 = vmatprep.subr.mxu0 0.0
        %702 = vmatpush1.xpose.msra.mxu0 0.0
        %703 = vmatprep.subr.mxu0 0.0
        %704 = vmatpush1.xpose.msra.mxu0 0.0
        %705 = vmatprep.subr.mxu0 0.0
        %706 = vmatpush1.xpose.msra.mxu0 0.0
        %707 = vmatprep.mubr.f32.mxu0 0.0
        %708 = vmatmul.mubr.f32.gmra.mrb[0].mxu0 %v638
        %v709 = vpop.f32.mrb[0].mxu0
        %v710 = vadd.f32 0.0, %v709
        %v711 = vpop.f32.mrb[0].mxu0
        %712 = vdwg.mxu0
        %v713 = vmul.f32 %v710, 0.35355338
        %v714 = vsel %vm636, %v713, -inf
        %715 = vmax.xlane.f32.xlu0 %v714
        %v716 = vpop.xlane.xlu0 %715
        %v717 = vsub.f32 %v713, %v716
        %v718 = vmul.f32 %v717, 1.442695
        %v719 = vpow.pop %v718
        %v720 = vsel %vm636, %v719, 0.0
        %721 = vadd.xlane.f32.xlu0 %v720
        %v722 = vpop.xlane.xlu0 %721
        %v723 = vrcp.pop %v722
        %v724 = vmul.f32 %v719, %v723
        %v726 = vsel %vm636, %v724, 0
        %728 = vmatprep.subr.mxu0 0.0
        %729 = vmatpush1.msra.mxu0 %v633
        %730 = vmatprep.subr.mxu0 0.0
        %731 = vmatpush1.msra.mxu0 0.0
        %732 = vmatprep.subr.mxu0 0.0
        %733 = vmatpush1.msra.mxu0 0.0
        %734 = vmatprep.subr.mxu0 0.0
        %735 = vmatpush1.msra.mxu0 0.0
        %736 = vmatprep.subr.mxu0 0.0
        %737 = vmatpush1.msra.mxu0 0.0
        %738 = vmatprep.subr.mxu0 0.0
        %739 = vmatpush1.msra.mxu0 0.0
        %740 = vmatprep.subr.mxu0 0.0
        %741 = vmatpush1.msra.mxu0 0.0
        %742 = vmatprep.subr.mxu0 0.0
        %743 = vmatpush1.msra.mxu0 0.0
        %744 = vmatprep.subr.mxu0 0.0
        %745 = vmatpush1.msra.mxu0 0.0
        %746 = vmatprep.subr.mxu0 0.0
        %747 = vmatpush1.msra.mxu0 0.0
        %748 = vmatprep.subr.mxu0 0.0
        %749 = vmatpush1.msra.mxu0 0.0
        %750 = vmatprep.subr.mxu0 0.0
        %751 = vmatpush1.msra.mxu0 0.0
        %752 = vmatprep.subr.mxu0 0.0
        %753 = vmatpush1.msra.mxu0 0.0
        %754 = vmatprep.subr.mxu0 0.0
        %755 = vmatpush1.msra.mxu0 0.0
        %756 = vmatprep.subr.mxu0 0.0
        %757 = vmatpush1.msra.mxu0 0.0
        %758 = vmatprep.subr.mxu0 0.0
        %759 = vmatpush1.msra.mxu0 0.0
        %760 = vmatprep.subr.mxu0 0.0
        %761 = vmatpush1.msra.mxu0 0.0
        %762 = vmatprep.subr.mxu0 0.0
        %763 = vmatpush1.msra.mxu0 0.0
        %764 = vmatprep.subr.mxu0 0.0
        %765 = vmatpush1.msra.mxu0 0.0
        %766 = vmatprep.subr.mxu0 0.0
        %767 = vmatpush1.msra.mxu0 0.0
        %768 = vmatprep.subr.mxu0 0.0
        %769 = vmatpush1.msra.mxu0 0.0
        %770 = vmatprep.subr.mxu0 0.0
        %771 = vmatpush1.msra.mxu0 0.0
        %772 = vmatprep.subr.mxu0 0.0
        %773 = vmatpush1.msra.mxu0 0.0
        %774 = vmatprep.subr.mxu0 0.0
        %775 = vmatpush1.msra.mxu0 0.0
        %776 = vmatprep.subr.mxu0 0.0
        %777 = vmatpush1.msra.mxu0 0.0
        %778 = vmatprep.subr.mxu0 0.0
        %779 = vmatpush1.msra.mxu0 0.0
        %780 = vmatprep.subr.mxu0 0.0
        %781 = vmatpush1.msra.mxu0 0.0
        %782 = vmatprep.subr.mxu0 0.0
        %783 = vmatpush1.msra.mxu0 0.0
        %784 = vmatprep.subr.mxu0 0.0
        %785 = vmatpush1.msra.mxu0 0.0
        %786 = vmatprep.subr.mxu0 0.0
        %787 = vmatpush1.msra.mxu0 0.0
        %788 = vmatprep.subr.mxu0 0.0
        %789 = vmatpush1.msra.mxu0 0.0
        %790 = vmatprep.subr.mxu0 0.0
        %791 = vmatpush1.msra.mxu0 0.0
        %792 = vmatprep.mubr.f32.mxu0 0.0
        %793 = vmatmul.mubr.f32.gmra.mrb[0].mxu0 %v726
        %v794 = vpop.f32.mrb[0].mxu0
        %v795 = vadd.f32 0.0, %v794
        %v796 = vpop.f32.mrb[0].mxu0
        %797 = vdwg.mxu0
        %798 = vrot.lane.b32.xlu0 %v485, 120
        %v799 = vpop.permute.xlu0 %798
        %800 = vrot.lane.b32.xlu0 %v559, 120
        %v801 = vpop.permute.xlu0 %800
        %v802 = vsel %vm636, %v799, 0
        %v804 = vsel %vm636, %v801, 0
        %806 = vmatprep.subr.mxu0 0.0
        %807 = vmatpush1.xpose.msra.mxu0 %v804
        %808 = vmatprep.subr.mxu0 0.0
        %809 = vmatpush1.xpose.msra.mxu0 0.0
        %810 = vmatprep.subr.mxu0 0.0
        %811 = vmatpush1.xpose.msra.mxu0 0.0
        %812 = vmatprep.subr.mxu0 0.0
        %813 = vmatpush1.xpose.msra.mxu0 0.0
        %814 = vmatprep.subr.mxu0 0.0
        %815 = vmatpush1.xpose.msra.mxu0 0.0
        %816 = vmatprep.subr.mxu0 0.0
        %817 = vmatpush1.xpose.msra.mxu0 0.0
        %818 = vmatprep.subr.mxu0 0.0
        %819 = vmatpush1.xpose.msra.mxu0 0.0
        %820 = vmatprep.subr.mxu0 0.0
        %821 = vmatpush1.xpose.msra.mxu0 0.0
        %822 = vmatprep.subr.mxu0 0.0
        %823 = vmatpush1.xpose.msra.mxu0 0.0
        %824 = vmatprep.subr.mxu0 0.0
        %825 = vmatpush1.xpose.msra.mxu0 0.0
        %826 = vmatprep.subr.mxu0 0.0
        %827 = vmatpush1.xpose.msra.mxu0 0.0
        %828 = vmatprep.subr.mxu0 0.0
        %829 = vmatpush1.xpose.msra.mxu0 0.0
        %830 = vmatprep.subr.mxu0 0.0
        %831 = vmatpush1.xpose.msra.mxu0 0.0
        %832 = vmatprep.subr.mxu0 0.0
        %833 = vmatpush1.xpose.msra.mxu0 0.0
        %834 = vmatprep.subr.mxu0 0.0
        %835 = vmatpush1.xpose.msra.mxu0 0.0
        %836 = vmatprep.subr.mxu0 0.0
        %837 = vmatpush1.xpose.msra.mxu0 0.0
        %838 = vmatprep.subr.mxu0 0.0
        %839 = vmatpush1.xpose.msra.mxu0 0.0
        %840 = vmatprep.subr.mxu0 0.0
        %841 = vmatpush1.xpose.msra.mxu0 0.0
        %842 = vmatprep.subr.mxu0 0.0
        %843 = vmatpush1.xpose.msra.mxu0 0.0
        %844 = vmatprep.subr.mxu0 0.0
        %845 = vmatpush1.xpose.msra.mxu0 0.0
        %846 = vmatprep.subr.mxu0 0.0
        %847 = vmatpush1.xpose.msra.mxu0 0.0
        %848 = vmatprep.subr.mxu0 0.0
        %849 = vmatpush1.xpose.msra.mxu0 0.0
        %850 = vmatprep.subr.mxu0 0.0
        %851 = vmatpush1.xpose.msra.mxu0 0.0
        %852 = vmatprep.subr.mxu0 0.0
        %853 = vmatpush1.xpose.msra.mxu0 0.0
        %854 = vmatprep.subr.mxu0 0.0
        %855 = vmatpush1.xpose.msra.mxu0 0.0
        %856 = vmatprep.subr.mxu0 0.0
        %857 = vmatpush1.xpose.msra.mxu0 0.0
        %858 = vmatprep.subr.mxu0 0.0
        %859 = vmatpush1.xpose.msra.mxu0 0.0
        %860 = vmatprep.subr.mxu0 0.0
        %861 = vmatpush1.xpose.msra.mxu0 0.0
        %862 = vmatprep.subr.mxu0 0.0
        %863 = vmatpush1.xpose.msra.mxu0 0.0
        %864 = vmatprep.subr.mxu0 0.0
        %865 = vmatpush1.xpose.msra.mxu0 0.0
        %866 = vmatprep.subr.mxu0 0.0
        %867 = vmatpush1.xpose.msra.mxu0 0.0
        %868 = vmatprep.subr.mxu0 0.0
        %869 = vmatpush1.xpose.msra.mxu0 0.0
        %870 = vmatprep.mubr.f32.mxu0 0.0
        %871 = vmatmul.mubr.f32.gmra.mrb[0].mxu0 %v802
        %v872 = vpop.f32.mrb[0].mxu0
        %v873 = vadd.f32 0.0, %v872
        %v874 = vpop.f32.mrb[0].mxu0
        %875 = vdwg.mxu0
        %v876 = vmul.f32 %v873, 0.35355338
        %v877 = vsel %vm636, %v876, -inf
        %878 = vmax.xlane.f32.xlu0 %v877
        %v879 = vpop.xlane.xlu0 %878
        %v880 = vsub.f32 %v876, %v879
        %v881 = vmul.f32 %v880, 1.442695
        %v882 = vpow.pop %v881
        %v883 = vsel %vm636, %v882, 0.0
        %884 = vadd.xlane.f32.xlu0 %v883
        %v885 = vpop.xlane.xlu0 %884
        %v886 = vrcp.pop %v885
        %v887 = vmul.f32 %v882, %v886
        %889 = vrot.lane.b32.xlu0 %v633, 120
        %v890 = vpop.permute.xlu0 %889
        %v893 = vsel %vm636, %v887, 0
        %895 = vmatprep.subr.mxu0 0.0
        %896 = vmatpush1.msra.mxu0 %v890
        %897 = vmatprep.subr.mxu0 0.0
        %898 = vmatpush1.msra.mxu0 0.0
        %899 = vmatprep.subr.mxu0 0.0
        %900 = vmatpush1.msra.mxu0 0.0
        %901 = vmatprep.subr.mxu0 0.0
        %902 = vmatpush1.msra.mxu0 0.0
        %903 = vmatprep.subr.mxu0 0.0
        %904 = vmatpush1.msra.mxu0 0.0
        %905 = vmatprep.subr.mxu0 0.0
        %906 = vmatpush1.msra.mxu0 0.0
        %907 = vmatprep.subr.mxu0 0.0
        %908 = vmatpush1.msra.mxu0 0.0
        %909 = vmatprep.subr.mxu0 0.0
        %910 = vmatpush1.msra.mxu0 0.0
        %911 = vmatprep.subr.mxu0 0.0
        %912 = vmatpush1.msra.mxu0 0.0
        %913 = vmatprep.subr.mxu0 0.0
        %914 = vmatpush1.msra.mxu0 0.0
        %915 = vmatprep.subr.mxu0 0.0
        %916 = vmatpush1.msra.mxu0 0.0
        %917 = vmatprep.subr.mxu0 0.0
        %918 = vmatpush1.msra.mxu0 0.0
        %919 = vmatprep.subr.mxu0 0.0
        %920 = vmatpush1.msra.mxu0 0.0
        %921 = vmatprep.subr.mxu0 0.0
        %922 = vmatpush1.msra.mxu0 0.0
        %923 = vmatprep.subr.mxu0 0.0
        %924 = vmatpush1.msra.mxu0 0.0
        %925 = vmatprep.subr.mxu0 0.0
        %926 = vmatpush1.msra.mxu0 0.0
        %927 = vmatprep.subr.mxu0 0.0
        %928 = vmatpush1.msra.mxu0 0.0
        %929 = vmatprep.subr.mxu0 0.0
        %930 = vmatpush1.msra.mxu0 0.0
        %931 = vmatprep.subr.mxu0 0.0
        %932 = vmatpush1.msra.mxu0 0.0
        %933 = vmatprep.subr.mxu0 0.0
        %934 = vmatpush1.msra.mxu0 0.0
        %935 = vmatprep.subr.mxu0 0.0
        %936 = vmatpush1.msra.mxu0 0.0
        %937 = vmatprep.subr.mxu0 0.0
        %938 = vmatpush1.msra.mxu0 0.0
        %939 = vmatprep.subr.mxu0 0.0
        %940 = vmatpush1.msra.mxu0 0.0
        %941 = vmatprep.subr.mxu0 0.0
        %942 = vmatpush1.msra.mxu0 0.0
        %943 = vmatprep.subr.mxu0 0.0
        %944 = vmatpush1.msra.mxu0 0.0
        %945 = vmatprep.subr.mxu0 0.0
        %946 = vmatpush1.msra.mxu0 0.0
        %947 = vmatprep.subr.mxu0 0.0
        %948 = vmatpush1.msra.mxu0 0.0
        %949 = vmatprep.subr.mxu0 0.0
        %950 = vmatpush1.msra.mxu0 0.0
        %951 = vmatprep.subr.mxu0 0.0
        %952 = vmatpush1.msra.mxu0 0.0
        %953 = vmatprep.subr.mxu0 0.0
        %954 = vmatpush1.msra.mxu0 0.0
        %955 = vmatprep.subr.mxu0 0.0
        %956 = vmatpush1.msra.mxu0 0.0
        %957 = vmatprep.subr.mxu0 0.0
        %958 = vmatpush1.msra.mxu0 0.0
        %959 = vmatprep.mubr.f32.mxu0 0.0
        %960 = vmatmul.mubr.f32.gmra.mrb[0].mxu0 %v893
        %v961 = vpop.f32.mrb[0].mxu0
        %v962 = vadd.f32 0.0, %v961
        %v963 = vpop.f32.mrb[0].mxu0
        %964 = vdwg.mxu0
        %965 = vrot.lane.b32.xlu0 %v485, 112
        %v966 = vpop.permute.xlu0 %965
        %967 = vrot.lane.b32.xlu0 %v559, 112
        %v968 = vpop.permute.xlu0 %967
        %v969 = vsel %vm636, %v966, 0
        %v971 = vsel %vm636, %v968, 0
        %973 = vmatprep.subr.mxu0 0.0
        %974 = vmatpush1.xpose.msra.mxu0 %v971
        %975 = vmatprep.subr.mxu0 0.0
        %976 = vmatpush1.xpose.msra.mxu0 0.0
        %977 = vmatprep.subr.mxu0 0.0
        %978 = vmatpush1.xpose.msra.mxu0 0.0
        %979 = vmatprep.subr.mxu0 0.0
        %980 = vmatpush1.xpose.msra.mxu0 0.0
        %981 = vmatprep.subr.mxu0 0.0
        %982 = vmatpush1.xpose.msra.mxu0 0.0
        %983 = vmatprep.subr.mxu0 0.0
        %984 = vmatpush1.xpose.msra.mxu0 0.0
        %985 = vmatprep.subr.mxu0 0.0
        %986 = vmatpush1.xpose.msra.mxu0 0.0
        %987 = vmatprep.subr.mxu0 0.0
        %988 = vmatpush1.xpose.msra.mxu0 0.0
        %989 = vmatprep.subr.mxu0 0.0
        %990 = vmatpush1.xpose.msra.mxu0 0.0
        %991 = vmatprep.subr.mxu0 0.0
        %992 = vmatpush1.xpose.msra.mxu0 0.0
        %993 = vmatprep.subr.mxu0 0.0
        %994 = vmatpush1.xpose.msra.mxu0 0.0
        %995 = vmatprep.subr.mxu0 0.0
        %996 = vmatpush1.xpose.msra.mxu0 0.0
        %997 = vmatprep.subr.mxu0 0.0
        %998 = vmatpush1.xpose.msra.mxu0 0.0
        %999 = vmatprep.subr.mxu0 0.0
        %1000 = vmatpush1.xpose.msra.mxu0 0.0
        %1001 = vmatprep.subr.mxu0 0.0
        %1002 = vmatpush1.xpose.msra.mxu0 0.0
        %1003 = vmatprep.subr.mxu0 0.0
        %1004 = vmatpush1.xpose.msra.mxu0 0.0
        %1005 = vmatprep.subr.mxu0 0.0
        %1006 = vmatpush1.xpose.msra.mxu0 0.0
        %1007 = vmatprep.subr.mxu0 0.0
        %1008 = vmatpush1.xpose.msra.mxu0 0.0
        %1009 = vmatprep.subr.mxu0 0.0
        %1010 = vmatpush1.xpose.msra.mxu0 0.0
        %1011 = vmatprep.subr.mxu0 0.0
        %1012 = vmatpush1.xpose.msra.mxu0 0.0
        %1013 = vmatprep.subr.mxu0 0.0
        %1014 = vmatpush1.xpose.msra.mxu0 0.0
        %1015 = vmatprep.subr.mxu0 0.0
        %1016 = vmatpush1.xpose.msra.mxu0 0.0
        %1017 = vmatprep.subr.mxu0 0.0
        %1018 = vmatpush1.xpose.msra.mxu0 0.0
        %1019 = vmatprep.subr.mxu0 0.0
        %1020 = vmatpush1.xpose.msra.mxu0 0.0
        %1021 = vmatprep.subr.mxu0 0.0
        %1022 = vmatpush1.xpose.msra.mxu0 0.0
        %1023 = vmatprep.subr.mxu0 0.0
        %1024 = vmatpush1.xpose.msra.mxu0 0.0
        %1025 = vmatprep.subr.mxu0 0.0
        %1026 = vmatpush1.xpose.msra.mxu0 0.0
        %1027 = vmatprep.subr.mxu0 0.0
        %1028 = vmatpush1.xpose.msra.mxu0 0.0
        %1029 = vmatprep.subr.mxu0 0.0
        %1030 = vmatpush1.xpose.msra.mxu0 0.0
        %1031 = vmatprep.subr.mxu0 0.0
        %1032 = vmatpush1.xpose.msra.mxu0 0.0
        %1033 = vmatprep.subr.mxu0 0.0
        %1034 = vmatpush1.xpose.msra.mxu0 0.0
        %1035 = vmatprep.subr.mxu0 0.0
        %1036 = vmatpush1.xpose.msra.mxu0 0.0
        %1037 = vmatprep.mubr.f32.mxu0 0.0
        %1038 = vmatmul.mubr.f32.gmra.mrb[0].mxu0 %v969
        %v1039 = vpop.f32.mrb[0].mxu0
        %v1040 = vadd.f32 0.0, %v1039
        %v1041 = vpop.f32.mrb[0].mxu0
        %1042 = vdwg.mxu0
        %v1043 = vmul.f32 %v1040, 0.35355338
        %v1044 = vsel %vm636, %v1043, -inf
        %1045 = vmax.xlane.f32.xlu0 %v1044
        %v1046 = vpop.xlane.xlu0 %1045
        %v1047 = vsub.f32 %v1043, %v1046
        %v1048 = vmul.f32 %v1047, 1.442695
        %v1049 = vpow.pop %v1048
        %v1050 = vsel %vm636, %v1049, 0.0
        %1051 = vadd.xlane.f32.xlu0 %v1050
        %v1052 = vpop.xlane.xlu0 %1051
        %v1053 = vrcp.pop %v1052
        %v1054 = vmul.f32 %v1049, %v1053
        %1055 = vrot.lane.b32.xlu0 %v633, 112
        %v1056 = vpop.permute.xlu0 %1055
        %v1059 = vsel %vm636, %v1054, 0
        %1061 = vmatprep.subr.mxu0 0.0
        %1062 = vmatpush1.msra.mxu0 %v1056
        %1063 = vmatprep.subr.mxu0 0.0
        %1064 = vmatpush1.msra.mxu0 0.0
        %1065 = vmatprep.subr.mxu0 0.0
        %1066 = vmatpush1.msra.mxu0 0.0
        %1067 = vmatprep.subr.mxu0 0.0
        %1068 = vmatpush1.msra.mxu0 0.0
        %1069 = vmatprep.subr.mxu0 0.0
        %1070 = vmatpush1.msra.mxu0 0.0
        %1071 = vmatprep.subr.mxu0 0.0
        %1072 = vmatpush1.msra.mxu0 0.0
        %1073 = vmatprep.subr.mxu0 0.0
        %1074 = vmatpush1.msra.mxu0 0.0
        %1075 = vmatprep.subr.mxu0 0.0
        %1076 = vmatpush1.msra.mxu0 0.0
        %1077 = vmatprep.subr.mxu0 0.0
        %1078 = vmatpush1.msra.mxu0 0.0
        %1079 = vmatprep.subr.mxu0 0.0
        %1080 = vmatpush1.msra.mxu0 0.0
        %1081 = vmatprep.subr.mxu0 0.0
        %1082 = vmatpush1.msra.mxu0 0.0
        %1083 = vmatprep.subr.mxu0 0.0
        %1084 = vmatpush1.msra.mxu0 0.0
        %1085 = vmatprep.subr.mxu0 0.0
        %1086 = vmatpush1.msra.mxu0 0.0
        %1087 = vmatprep.subr.mxu0 0.0
        %1088 = vmatpush1.msra.mxu0 0.0
        %1089 = vmatprep.subr.mxu0 0.0
        %1090 = vmatpush1.msra.mxu0 0.0
        %1091 = vmatprep.subr.mxu0 0.0
        %1092 = vmatpush1.msra.mxu0 0.0
        %1093 = vmatprep.subr.mxu0 0.0
        %1094 = vmatpush1.msra.mxu0 0.0
        %1095 = vmatprep.subr.mxu0 0.0
        %1096 = vmatpush1.msra.mxu0 0.0
        %1097 = vmatprep.subr.mxu0 0.0
        %1098 = vmatpush1.msra.mxu0 0.0
        %1099 = vmatprep.subr.mxu0 0.0
        %1100 = vmatpush1.msra.mxu0 0.0
        %1101 = vmatprep.subr.mxu0 0.0
        %1102 = vmatpush1.msra.mxu0 0.0
        %1103 = vmatprep.subr.mxu0 0.0
        %1104 = vmatpush1.msra.mxu0 0.0
        %1105 = vmatprep.subr.mxu0 0.0
        %1106 = vmatpush1.msra.mxu0 0.0
        %1107 = vmatprep.subr.mxu0 0.0
        %1108 = vmatpush1.msra.mxu0 0.0
        %1109 = vmatprep.subr.mxu0 0.0
        %1110 = vmatpush1.msra.mxu0 0.0
        %1111 = vmatprep.subr.mxu0 0.0
        %1112 = vmatpush1.msra.mxu0 0.0
        %1113 = vmatprep.subr.mxu0 0.0
        %1114 = vmatpush1.msra.mxu0 0.0
        %1115 = vmatprep.subr.mxu0 0.0
        %1116 = vmatpush1.msra.mxu0 0.0
        %1117 = vmatprep.subr.mxu0 0.0
        %1118 = vmatpush1.msra.mxu0 0.0
        %1119 = vmatprep.subr.mxu0 0.0
        %1120 = vmatpush1.msra.mxu0 0.0
        %1121 = vmatprep.subr.mxu0 0.0
        %1122 = vmatpush1.msra.mxu0 0.0
        %1123 = vmatprep.subr.mxu0 0.0
        %1124 = vmatpush1.msra.mxu0 0.0
        %1125 = vmatprep.mubr.f32.mxu0 0.0
        %1126 = vmatmul.mubr.f32.gmra.mrb[0].mxu0 %v1059
        %v1127 = vpop.f32.mrb[0].mxu0
        %v1128 = vadd.f32 0.0, %v1127
        %v1129 = vpop.f32.mrb[0].mxu0
        %1130 = vdwg.mxu0
        %1131 = vrot.lane.b32.xlu0 %v485, 104
        %v1132 = vpop.permute.xlu0 %1131
        %1133 = vrot.lane.b32.xlu0 %v559, 104
        %v1134 = vpop.permute.xlu0 %1133
        %v1135 = vsel %vm636, %v1132, 0
        %v1137 = vsel %vm636, %v1134, 0
        %1139 = vmatprep.subr.mxu0 0.0
        %1140 = vmatpush1.xpose.msra.mxu0 %v1137
        %1141 = vmatprep.subr.mxu0 0.0
        %1142 = vmatpush1.xpose.msra.mxu0 0.0
        %1143 = vmatprep.subr.mxu0 0.0
        %1144 = vmatpush1.xpose.msra.mxu0 0.0
        %1145 = vmatprep.subr.mxu0 0.0
        %1146 = vmatpush1.xpose.msra.mxu0 0.0
        %1147 = vmatprep.subr.mxu0 0.0
        %1148 = vmatpush1.xpose.msra.mxu0 0.0
        %1149 = vmatprep.subr.mxu0 0.0
        %1150 = vmatpush1.xpose.msra.mxu0 0.0
        %1151 = vmatprep.subr.mxu0 0.0
        %1152 = vmatpush1.xpose.msra.mxu0 0.0
        %1153 = vmatprep.subr.mxu0 0.0
        %1154 = vmatpush1.xpose.msra.mxu0 0.0
        %1155 = vmatprep.subr.mxu0 0.0
        %1156 = vmatpush1.xpose.msra.mxu0 0.0
        %1157 = vmatprep.subr.mxu0 0.0
        %1158 = vmatpush1.xpose.msra.mxu0 0.0
        %1159 = vmatprep.subr.mxu0 0.0
        %1160 = vmatpush1.xpose.msra.mxu0 0.0
        %1161 = vmatprep.subr.mxu0 0.0
        %1162 = vmatpush1.xpose.msra.mxu0 0.0
        %1163 = vmatprep.subr.mxu0 0.0
        %1164 = vmatpush1.xpose.msra.mxu0 0.0
        %1165 = vmatprep.subr.mxu0 0.0
        %1166 = vmatpush1.xpose.msra.mxu0 0.0
        %1167 = vmatprep.subr.mxu0 0.0
        %1168 = vmatpush1.xpose.msra.mxu0 0.0
        %1169 = vmatprep.subr.mxu0 0.0
        %1170 = vmatpush1.xpose.msra.mxu0 0.0
        %1171 = vmatprep.subr.mxu0 0.0
        %1172 = vmatpush1.xpose.msra.mxu0 0.0
        %1173 = vmatprep.subr.mxu0 0.0
        %1174 = vmatpush1.xpose.msra.mxu0 0.0
        %1175 = vmatprep.subr.mxu0 0.0
        %1176 = vmatpush1.xpose.msra.mxu0 0.0
        %1177 = vmatprep.subr.mxu0 0.0
        %1178 = vmatpush1.xpose.msra.mxu0 0.0
        %1179 = vmatprep.subr.mxu0 0.0
        %1180 = vmatpush1.xpose.msra.mxu0 0.0
        %1181 = vmatprep.subr.mxu0 0.0
        %1182 = vmatpush1.xpose.msra.mxu0 0.0
        %1183 = vmatprep.subr.mxu0 0.0
        %1184 = vmatpush1.xpose.msra.mxu0 0.0
        %1185 = vmatprep.subr.mxu0 0.0
        %1186 = vmatpush1.xpose.msra.mxu0 0.0
        %1187 = vmatprep.subr.mxu0 0.0
        %1188 = vmatpush1.xpose.msra.mxu0 0.0
        %1189 = vmatprep.subr.mxu0 0.0
        %1190 = vmatpush1.xpose.msra.mxu0 0.0
        %1191 = vmatprep.subr.mxu0 0.0
        %1192 = vmatpush1.xpose.msra.mxu0 0.0
        %1193 = vmatprep.subr.mxu0 0.0
        %1194 = vmatpush1.xpose.msra.mxu0 0.0
        %1195 = vmatprep.subr.mxu0 0.0
        %1196 = vmatpush1.xpose.msra.mxu0 0.0
        %1197 = vmatprep.subr.mxu0 0.0
        %1198 = vmatpush1.xpose.msra.mxu0 0.0
        %1199 = vmatprep.subr.mxu0 0.0
        %1200 = vmatpush1.xpose.msra.mxu0 0.0
        %1201 = vmatprep.subr.mxu0 0.0
        %1202 = vmatpush1.xpose.msra.mxu0 0.0
        %1203 = vmatprep.mubr.f32.mxu0 0.0
        %1204 = vmatmul.mubr.f32.gmra.mrb[0].mxu0 %v1135
        %v1205 = vpop.f32.mrb[0].mxu0
        %v1206 = vadd.f32 0.0, %v1205
        %v1207 = vpop.f32.mrb[0].mxu0
        %1208 = vdwg.mxu0
        %v1209 = vmul.f32 %v1206, 0.35355338
        %v1210 = vsel %vm636, %v1209, -inf
        %1211 = vmax.xlane.f32.xlu0 %v1210
        %v1212 = vpop.xlane.xlu0 %1211
        %v1213 = vsub.f32 %v1209, %v1212
        %v1214 = vmul.f32 %v1213, 1.442695
        %v1215 = vpow.pop %v1214
        %v1216 = vsel %vm636, %v1215, 0.0
        %1217 = vadd.xlane.f32.xlu0 %v1216
        %v1218 = vpop.xlane.xlu0 %1217
        %v1219 = vrcp.pop %v1218
        %v1220 = vmul.f32 %v1215, %v1219
        %1221 = vrot.lane.b32.xlu0 %v633, 104
        %v1222 = vpop.permute.xlu0 %1221
        %v1225 = vsel %vm636, %v1220, 0
        %1227 = vmatprep.subr.mxu0 0.0
        %1228 = vmatpush1.msra.mxu0 %v1222
        %1229 = vmatprep.subr.mxu0 0.0
        %1230 = vmatpush1.msra.mxu0 0.0
        %1231 = vmatprep.subr.mxu0 0.0
        %1232 = vmatpush1.msra.mxu0 0.0
        %1233 = vmatprep.subr.mxu0 0.0
        %1234 = vmatpush1.msra.mxu0 0.0
        %1235 = vmatprep.subr.mxu0 0.0
        %1236 = vmatpush1.msra.mxu0 0.0
        %1237 = vmatprep.subr.mxu0 0.0
        %1238 = vmatpush1.msra.mxu0 0.0
        %1239 = vmatprep.subr.mxu0 0.0
        %1240 = vmatpush1.msra.mxu0 0.0
        %1241 = vmatprep.subr.mxu0 0.0
        %1242 = vmatpush1.msra.mxu0 0.0
        %1243 = vmatprep.subr.mxu0 0.0
        %1244 = vmatpush1.msra.mxu0 0.0
        %1245 = vmatprep.subr.mxu0 0.0
        %1246 = vmatpush1.msra.mxu0 0.0
        %1247 = vmatprep.subr.mxu0 0.0
        %1248 = vmatpush1.msra.mxu0 0.0
        %1249 = vmatprep.subr.mxu0 0.0
        %1250 = vmatpush1.msra.mxu0 0.0
        %1251 = vmatprep.subr.mxu0 0.0
        %1252 = vmatpush1.msra.mxu0 0.0
        %1253 = vmatprep.subr.mxu0 0.0
        %1254 = vmatpush1.msra.mxu0 0.0
        %1255 = vmatprep.subr.mxu0 0.0
        %1256 = vmatpush1.msra.mxu0 0.0
        %1257 = vmatprep.subr.mxu0 0.0
        %1258 = vmatpush1.msra.mxu0 0.0
        %1259 = vmatprep.subr.mxu0 0.0
        %1260 = vmatpush1.msra.mxu0 0.0
        %1261 = vmatprep.subr.mxu0 0.0
        %1262 = vmatpush1.msra.mxu0 0.0
        %1263 = vmatprep.subr.mxu0 0.0
        %1264 = vmatpush1.msra.mxu0 0.0
        %1265 = vmatprep.subr.mxu0 0.0
        %1266 = vmatpush1.msra.mxu0 0.0
        %1267 = vmatprep.subr.mxu0 0.0
        %1268 = vmatpush1.msra.mxu0 0.0
        %1269 = vmatprep.subr.mxu0 0.0
        %1270 = vmatpush1.msra.mxu0 0.0
        %1271 = vmatprep.subr.mxu0 0.0
        %1272 = vmatpush1.msra.mxu0 0.0
        %1273 = vmatprep.subr.mxu0 0.0
        %1274 = vmatpush1.msra.mxu0 0.0
        %1275 = vmatprep.subr.mxu0 0.0
        %1276 = vmatpush1.msra.mxu0 0.0
        %1277 = vmatprep.subr.mxu0 0.0
        %1278 = vmatpush1.msra.mxu0 0.0
        %1279 = vmatprep.subr.mxu0 0.0
        %1280 = vmatpush1.msra.mxu0 0.0
        %1281 = vmatprep.subr.mxu0 0.0
        %1282 = vmatpush1.msra.mxu0 0.0
        %1283 = vmatprep.subr.mxu0 0.0
        %1284 = vmatpush1.msra.mxu0 0.0
        %1285 = vmatprep.subr.mxu0 0.0
        %1286 = vmatpush1.msra.mxu0 0.0
        %1287 = vmatprep.subr.mxu0 0.0
        %1288 = vmatpush1.msra.mxu0 0.0
        %1289 = vmatprep.subr.mxu0 0.0
        %1290 = vmatpush1.msra.mxu0 0.0
        %1291 = vmatprep.mubr.f32.mxu0 0.0
        %1292 = vmatmul.mubr.f32.gmra.mrb[0].mxu0 %v1225
        %v1293 = vpop.f32.mrb[0].mxu0
        %v1294 = vadd.f32 0.0, %v1293
        %v1295 = vpop.f32.mrb[0].mxu0
        %1296 = vdwg.mxu0
        %1298 = vrot.lane.b32.xlu0 %v962, 8
        %v1299 = vpop.permute.xlu0 %1298
        %1302 = vrot.lane.b32.xlu0 %v1128, 16
        %v1303 = vpop.permute.xlu0 %1302
        %1306 = vrot.lane.b32.xlu0 %v1294, 24
        %v1307 = vpop.permute.xlu0 %1306
        %v1309 = vsel %vm636, %v795, %v1299
        %vm1310 = vcmask 130048
        %v1311 = vsel %vm1310, %v1309, %v1303
        %vm1312 = vcmask 195584
        %v1313 = vsel %vm1312, %v1311, %v1307
        %v1314 = vld [vmem:[#allocation10] sm:$0xff]
        %v1315 = vld [vmem:[#allocation10 + $0x8] sm:$0xff]
        %v1316 = vld [vmem:[#allocation10 + $0x10] sm:$0xff]
        %v1317 = vld [vmem:[#allocation10 + $0x18] sm:$0xff]
        %v1318 = vld [vmem:[%s7] sm:$0x1]
        %v1320 = vlaneseq
        %v1321 = vshrl.u32 %v1320, 7
        %v1322 = vsub.s32 0, %v1321
        %v1323 = vrot.slane %v1318, %v1322
        %v1326 = vsel %vm382, %v1313, 0
        %1328 = vmatprep.subr.mxu0 0.0
        %1329 = vmatpush1.msra.mxu0 %v1314
        %1330 = vmatprep.subr.mxu0 0.0
        %1331 = vmatpush1.msra.mxu0 %v1315
        %1332 = vmatprep.subr.mxu0 0.0
        %1333 = vmatpush1.msra.mxu0 %v1316
        %1334 = vmatprep.subr.mxu0 0.0
        %1335 = vmatpush1.msra.mxu0 %v1317
        %1336 = vmatprep.subr.mxu0 0.0
        %1337 = vmatpush1.msra.mxu0 0.0
        %1338 = vmatprep.subr.mxu0 0.0
        %1339 = vmatpush1.msra.mxu0 0.0
        %1340 = vmatprep.subr.mxu0 0.0
        %1341 = vmatpush1.msra.mxu0 0.0
        %1342 = vmatprep.subr.mxu0 0.0
        %1343 = vmatpush1.msra.mxu0 0.0
        %1344 = vmatprep.subr.mxu0 0.0
        %1345 = vmatpush1.msra.mxu0 0.0
        %1346 = vmatprep.subr.mxu0 0.0
        %1347 = vmatpush1.msra.mxu0 0.0
        %1348 = vmatprep.subr.mxu0 0.0
        %1349 = vmatpush1.msra.mxu0 0.0
        %1350 = vmatprep.subr.mxu0 0.0
        %1351 = vmatpush1.msra.mxu0 0.0
        %1352 = vmatprep.subr.mxu0 0.0
        %1353 = vmatpush1.msra.mxu0 0.0
        %1354 = vmatprep.subr.mxu0 0.0
        %1355 = vmatpush1.msra.mxu0 0.0
        %1356 = vmatprep.subr.mxu0 0.0
        %1357 = vmatpush1.msra.mxu0 0.0
        %1358 = vmatprep.subr.mxu0 0.0
        %1359 = vmatpush1.msra.mxu0 0.0
        %1360 = vmatprep.subr.mxu0 0.0
        %1361 = vmatpush1.msra.mxu0 0.0
        %1362 = vmatprep.subr.mxu0 0.0
        %1363 = vmatpush1.msra.mxu0 0.0
        %1364 = vmatprep.subr.mxu0 0.0
        %1365 = vmatpush1.msra.mxu0 0.0
        %1366 = vmatprep.subr.mxu0 0.0
        %1367 = vmatpush1.msra.mxu0 0.0
        %1368 = vmatprep.subr.mxu0 0.0
        %1369 = vmatpush1.msra.mxu0 0.0
        %1370 = vmatprep.subr.mxu0 0.0
        %1371 = vmatpush1.msra.mxu0 0.0
        %1372 = vmatprep.subr.mxu0 0.0
        %1373 = vmatpush1.msra.mxu0 0.0
        %1374 = vmatprep.subr.mxu0 0.0
        %1375 = vmatpush1.msra.mxu0 0.0
        %1376 = vmatprep.subr.mxu0 0.0
        %1377 = vmatpush1.msra.mxu0 0.0
        %1378 = vmatprep.subr.mxu0 0.0
        %1379 = vmatpush1.msra.mxu0 0.0
        %1380 = vmatprep.subr.mxu0 0.0
        %1381 = vmatpush1.msra.mxu0 0.0
        %1382 = vmatprep.subr.mxu0 0.0
        %1383 = vmatpush1.msra.mxu0 0.0
        %1384 = vmatprep.subr.mxu0 0.0
        %1385 = vmatpush1.msra.mxu0 0.0
        %1386 = vmatprep.subr.mxu0 0.0
        %1387 = vmatpush1.msra.mxu0 0.0
        %1388 = vmatprep.subr.mxu0 0.0
        %1389 = vmatpush1.msra.mxu0 0.0
        %1390 = vmatprep.subr.mxu0 0.0
        %1391 = vmatpush1.msra.mxu0 0.0
        %1392 = vmatprep.mubr.f32.mxu0 0.0
        %1393 = vmatmul.mubr.f32.gmra.mrb[0].mxu0 %v1326
        %v1394 = vpop.f32.mrb[0].mxu0
        %v1395 = vadd.f32 %v1323, %v1394
        %v1396 = vpop.f32.mrb[0].mxu0
        %1397 = vdwg.mxu0
        %v1398 = vadd.f32 %v1395, %v379
        %1399 = vst.msk [vmem:[%s378] sm:$0xff] %vm382, %v1398
        %s1400 = sand.u32 %s208, 1
        %s1401 = scalar_lea.sflag [#allocation4], %s1400
        %s1402 = sand.u32 %s208, 1
        %s1403 = smul.addr %s1402, 8
        %s1404 = scalar_lea.vmem [#allocation11], %s1403
        // Predicated region
        $region73: #{tpu_custom_call.1} parent=51 // pred_check
          %p1405 = pneg %p218
        $region74: #{tpu_custom_call.1} parent=51 // pred_check_branch
          %1407 = sbr.rel (%p1405) target = $region76
        $region75: #{tpu_custom_call.1} parent=51 // pred_region
          %s1409 = ssub.s32 128, 128
          %1410 = vsyncadd %s1401, %s1409
          %s1411 = smul.addr %s27, 128
          %s1412 = scalar_lea.hbm %s8, %s1411
          %s1414 = sshll.u32 %s1404, 4
          %s1415 = int_to_ptr.vmem [resolvable:$true] %s1414
          %1417 = dma.vmem_to_hbm [thread:$0]  %s1415, 128, %s1412, %s1401
        $region76: #{tpu_custom_call.1} parent=51 // pred_fallthru
          _
      $region52: #{tpu_custom_call.1} parent=5 // pred_fallthru
        _
      %p1418 = scmp.le.s32.totalorder 2, %s22
      // Predicated region
      $region77: #{tpu_custom_call.1} parent=5 // pred_check
        %p1419 = pneg %p1418
      $region78: #{tpu_custom_call.1} parent=5 // pred_check_branch
        %1421 = sbr.rel (%p1419) target = $region80
      $region79: #{tpu_custom_call.1} parent=5 // pred_region
        %s1422 = ssub.s32 %s22, 2
        // Predicated region
        $region81: #{tpu_custom_call.1} parent=79 // pred_check
          %p1423 = pneg %p224
        $region82: #{tpu_custom_call.1} parent=79 // pred_check_branch
          %1425 = sbr.rel (%p1423) target = $region84
        $region83: #{tpu_custom_call.1} parent=79 // pred_region
          %s1426 = sand.u32 %s209, 1
          %s1427 = scalar_lea.sflag [#allocation4], %s1426
          %s1428 = sand.u32 %s209, 1
          %s1429 = smul.addr %s1428, 8
          %s1430 = scalar_lea.vmem [#allocation11], %s1429
          %1431 = dma.done %s1427, 128
        $region84: #{tpu_custom_call.1} parent=79 // pred_fallthru
          _
      $region80: #{tpu_custom_call.1} parent=5 // pred_fallthru
        _
    $region6: #{tpu_custom_call.1} parent=1 // loop_footer
      %s26 = sadd.s32 1, %s22
    $region7: #{tpu_custom_call.1} parent=1 // loop_footer_branch
      %21 = sbr.rel target = $region3
    $region8: #{tpu_custom_call.1} parent=1 // loop_exit
      _
    %1432 = vsyncpa [#allocation3], 1
    %s1433 = scalar_lea.sflag [#allocation3], 1
    %1434 = vsyncpa %s1433, 1
    %1435 = vsyncpa [#allocation6], 1
    %1436 = vsyncpa [#allocation9], 1
    %1437 = vsyncpa [#allocation4], 1
    %s1438 = scalar_lea.sflag [#allocation4], 1
    %1439 = vsyncpa %s1438, 1

</llo_original>
